<compile_context>
chip_gen: v7x
topology: tpu7x:2x2x1
jax: 0.10.0
libtpu: 0.0.40
codegen_flags: <defaults>
</compile_context>

<pallas_src>
import numpy as np
import jax
import jax.numpy as jnp
from jax.experimental import pallas as pl
from jax.experimental.pallas import tpu as pltpu

# ----------------------------- configuration --------------------------------
B = 2            # batch
C_EEG = 8        # n_channels
T = 64           # input time samples           (B * T = 128 -> one full lane row)
F = 8            # n_temporal_filters (spatial_expansion = 1)
K_INP = 5        # temp_filter_length_inp
PAD_INP = K_INP // 2
POOL_INP = 2     # pool_length_inp (in [1, 2, 5, 10])
D = 16           # ch_dim
K_FE = 5         # temp_filter_length
PAD_FE = K_FE // 2
SFREQ = 32
WINDOW_LENGTH = 0.5
F_UPDATE = 8
N_CLASSES = 2    # -> classifier output dim = 1

F_INTER = SFREQ // POOL_INP                    # 16
POOL_LEN = int(F_INTER * WINDOW_LENGTH)        # 8
POOL_STRIDE = int(F_INTER / F_UPDATE)          # 2
T1 = T // POOL_INP                             # 32
T_OUT = (T1 - POOL_LEN) // POOL_STRIDE + 1     # 13
BN_EPS = 1e-5

BT = B * T                                     # 128 lanes, batch-major (b*T + t)
N_OUT = B * T_OUT                              # 26
assert BT == 128                               # lane-layout assumption of the kernel

# ---- packed-parameter slab layouts (all row offsets are multiples of 8) ----
SMALL_COLS = 16
R_W1, R_B1, R_W2, R_B2 = 0, 40, 48, 64
R_W3, R_B3, R_WCLS, R_BCLS = 80, 96, 112, 120
SMALL_ROWS = 128

R_P1 = 0
R_P2 = R_P1 + BT                               # 128
R_S1 = R_P2 + BT                               # 256
R_S2 = R_S1 + K_INP * BT                       # 896
R_WFE = R_S2 + K_FE * BT                       # 1536
BIG_ROWS = R_WFE + K_FE * D                    # 1616


# ------------------------------- the kernel ---------------------------------
def _elu(v):
    return jnp.where(v > 0, v, jnp.exp(jnp.minimum(v, 0.0)) - 1.0)


def basenet_kernel(x_ref, small_ref, big_ref, o_ref):
    x = x_ref[...]                                            # (C_EEG, BT) = (8, 128)

    # ---- input block: temporal conv + bn1 + grouped spatial conv + bn2 (folded) ----
    # each tap: (F, C_EEG) weight matmul, then banded shift+validity matmul
    z = None
    for k in range(K_INP):                                    # static, tiny unroll
        w1k = small_ref[R_W1 + k * F:R_W1 + (k + 1) * F, 0:C_EEG]    # (F, C_EEG)
        s1k = big_ref[R_S1 + k * BT:R_S1 + (k + 1) * BT, :]          # (BT, BT)
        term = jnp.dot(
            jnp.dot(w1k, x, preferred_element_type=jnp.float32),
            s1k, preferred_element_type=jnp.float32)
        z = term if z is None else z + term
    z = z + small_ref[R_B1:R_B1 + F, 0:1]                     # folded bias   (F, BT)
    z = _elu(z)

    # ---- avg-pool 1: block-diagonal matrix, output compacted to lanes [0, B*T1) ----
    pooled = jnp.dot(z, big_ref[R_P1:R_P1 + BT, :],
                     preferred_element_type=jnp.float32)       # (F, BT)

    # ---- channel expansion: 1x1 conv with bn3 scale folded ----
    e = jnp.dot(small_ref[R_W2:R_W2 + D, 0:F], pooled,
                preferred_element_type=jnp.float32)
    e = e + small_ref[R_B2:R_B2 + D, 0:1]
    e = _elu(e)                                               # (D, BT)

    # ---- feature extractor: depthwise conv via shift-matrix matmuls ----
    g = None
    for k in range(K_FE):
        s2k = big_ref[R_S2 + k * BT:R_S2 + (k + 1) * BT, :]          # (BT, BT)
        wfk = big_ref[R_WFE + k * D:R_WFE + (k + 1) * D, :]          # (D, BT) bcast wts
        term = wfk * jnp.dot(e, s2k, preferred_element_type=jnp.float32)
        g = term if g is None else g + term
    # 1x1 conv + bn4 (scale folded into the weight, shift kept as bias)
    g = jnp.dot(small_ref[R_W3:R_W3 + D, 0:D], g,
                preferred_element_type=jnp.float32)
    g = g + small_ref[R_B3:R_B3 + D, 0:1]
    g = _elu(g)                                               # (D, BT)

    # ---- classifier first (both linear), then avg-pool 2 ----
    pre = jnp.dot(small_ref[R_WCLS:R_WCLS + 8, 0:D], g,
                  preferred_element_type=jnp.float32)          # (8, BT), row 0 real
    out = jnp.dot(pre, big_ref[R_P2:R_P2 + BT, :],
                  preferred_element_type=jnp.float32)          # (8, BT)
    o_ref[...] = out + small_ref[R_BCLS:R_BCLS + 1, 0:1]


# ------------------------------- wrapper -------------------------------------
@jax.jit
def basenet_forward(x, small_slab, big_slab):
    """x: (B, C_eeg, T) f32 -> (B, T_OUT, 1) f32 (matches the PyTorch module)."""
    b, c_eeg, t = x.shape
    # layout plumbing: channels on sublanes, batch*time on the 128-lane axis
    x2d = jnp.transpose(x, (1, 0, 2)).reshape(c_eeg, b * t)

    out = pl.pallas_call(
        basenet_kernel,
        out_shape=jax.ShapeDtypeStruct((8, BT), jnp.float32),
        grid_spec=pltpu.PrefetchScalarGridSpec(
            num_scalar_prefetch=0,
            grid=(1,),                                   # single step: no per-batch grid
            in_specs=[
                pl.BlockSpec((C_EEG, BT), lambda i: (0, 0)),
                pl.BlockSpec((SMALL_ROWS, SMALL_COLS), lambda i: (0, 0)),
                pl.BlockSpec((BIG_ROWS, BT), lambda i: (0, 0)),
            ],
            out_specs=pl.BlockSpec((8, BT), lambda i: (0, 0)),
        ),
        compiler_params=pltpu.CompilerParams(
            dimension_semantics=("arbitrary",)),
    )(x2d, small_slab, big_slab)
    # row 0 holds the logits; lane order is b*T_OUT + t  ->  (B, T_OUT, 1)
    return out[0, :N_OUT].reshape(b, T_OUT, 1)


# --------------------------- plain-JAX reference -----------------------------
def basenet_reference(x, params):
    (w_temp, s1, h1, w_spat, s2, h2, p1,
     w_ce, s3, h3, w_fe1, w_fe2, s4, h4, p2, w_cls, b_cls) = params
    b, c_eeg, t = x.shape
    f, k_inp = w_temp.shape
    pad = k_inp // 2
    xp = jnp.pad(x, ((0, 0), (0, 0), (pad, pad)))
    y = jnp.zeros((b, f, c_eeg, t), jnp.float32)
    for k in range(k_inp):
        y = y + w_temp[None, :, None, k:k + 1] * xp[:, None, :, k:k + t]
    y = y * s1.reshape(1, f, 1, 1) + h1.reshape(1, f, 1, 1)
    z = jnp.sum(y * w_spat[None, :, :, None], axis=2)           # (B, F, T)
    z = z * s2.reshape(1, f, 1) + h2.reshape(1, f, 1)
    z = jnp.where(z > 0, z, jnp.exp(jnp.minimum(z, 0.0)) - 1.0)
    z = jnp.einsum('bft,tu->bfu', z, p1)                        # (B, F, T1)
    e = jnp.einsum('df,bft->bdt', w_ce, z)                      # (B, D, T1)
    d = w_ce.shape[0]
    e = e * s3.reshape(1, d, 1) + h3.reshape(1, d, 1)
    e = jnp.where(e > 0, e, jnp.exp(jnp.minimum(e, 0.0)) - 1.0)
    k_fe = w_fe1.shape[1]
    padf = k_fe // 2
    t1 = e.shape[-1]
    ep = jnp.pad(e, ((0, 0), (0, 0), (padf, padf)))
    g = jnp.zeros((b, d, t1), jnp.float32)
    for k in range(k_fe):
        g = g + w_fe1[None, :, k:k + 1] * ep[:, :, k:k + t1]
    g = jnp.einsum('ed,bdt->bet', w_fe2, g)
    g = g * s4.reshape(1, d, 1) + h4.reshape(1, d, 1)
    g = jnp.where(g > 0, g, jnp.exp(jnp.minimum(g, 0.0)) - 1.0)
    g = jnp.einsum('bdt,tu->bdu', g, p2)                        # (B, D, T_OUT)
    logits = jnp.einsum('od,bdt->bot', w_cls, g) + b_cls.reshape(1, 1, 1)
    return jnp.transpose(logits, (0, 2, 1))                     # (B, T_OUT, 1)


# ----------------------------- param factory ---------------------------------
def make_bn_affine(key, n):
    kg, kb, km, kv = jax.random.split(key, 4)
    gamma = jax.random.uniform(kg, (n, 1), jnp.float32, 0.8, 1.2)
    beta = 0.1 * jax.random.normal(kb, (n, 1), jnp.float32)
    rmean = 0.1 * jax.random.normal(km, (n, 1), jnp.float32)
    rvar = jax.random.uniform(kv, (n, 1), jnp.float32, 0.5, 1.5)
    scale = gamma / jnp.sqrt(rvar + BN_EPS)
    shift = beta - rmean * scale
    return scale, shift


def make_params(key):
    ks = jax.random.split(key, 12)
    w_temp = 0.3 * jax.random.normal(ks[0], (F, K_INP), jnp.float32)
    s1, h1 = make_bn_affine(ks[1], F)
    w_spat = 0.3 * jax.random.normal(ks[2], (F, C_EEG), jnp.float32)
    s2, h2 = make_bn_affine(ks[3], F)
    w_ce = 0.3 * jax.random.normal(ks[4], (D, F), jnp.float32)
    s3, h3 = make_bn_affine(ks[5], D)
    w_fe1 = 0.3 * jax.random.normal(ks[6], (D, K_FE), jnp.float32)
    w_fe2 = 0.3 * jax.random.normal(ks[7], (D, D), jnp.float32)
    s4, h4 = make_bn_affine(ks[8], D)
    w_cls = 0.3 * jax.random.normal(ks[9], (1, D), jnp.float32)
    b_cls = 0.1 * jax.random.normal(ks[10], (1, 1), jnp.float32)

    # per-batch-element pooling matrices (used only by the plain-JAX reference)
    r1 = jnp.arange(T)[:, None]
    j1 = jnp.arange(T1)[None, :]
    p1 = ((r1 // POOL_INP) == j1).astype(jnp.float32) / POOL_INP      # (T, T1)
    r2 = jnp.arange(T1)[:, None]
    j2 = jnp.arange(T_OUT)[None, :]
    p2 = ((r2 >= j2 * POOL_STRIDE) &
          (r2 < j2 * POOL_STRIDE + POOL_LEN)).astype(jnp.float32) / POOL_LEN

    return (w_temp, s1, h1, w_spat, s2, h2, p1,
            w_ce, s3, h3, w_fe1, w_fe2, s4, h4, p2, w_cls, b_cls)


# ------------------- one-time weight folding + slab packing ------------------
def pack_params(params):
    (w_temp, s1, h1, w_spat, s2, h2, _p1, w_ce, s3, h3,
     w_fe1, w_fe2, s4, h4, _p2, w_cls, b_cls) = params
    s1f, h1f = s1[:, 0], h1[:, 0]
    s2f, h2f = s2[:, 0], h2[:, 0]
    s3f, h3f = s3[:, 0], h3[:, 0]
    s4f, h4f = s4[:, 0], h4[:, 0]

    # fold bn1 + spatial conv + bn2 into the temporal conv
    w1 = (s1f * s2f)[None, :, None] * w_spat[None, :, :] \
        * jnp.transpose(w_temp)[:, :, None]                  # (K_INP, F, C_EEG)
    bias1 = s2f * h1f * jnp.sum(w_spat, axis=1) + h2f        # (F,)
    w2 = s3f[:, None] * w_ce                                 # (D, F)  bn3 scale folded
    bias2 = h3f                                              # (D,)
    w3 = s4f[:, None] * w_fe2                                # (D, D)  bn4 scale folded
    bias3 = h4f                                              # (D,)

    def colpad(a):
        return jnp.pad(a, ((0, 0), (0, SMALL_COLS - a.shape[1])))

    def col0(v):
        return jnp.zeros((v.shape[0], SMALL_COLS), jnp.float32).at[:, 0].set(v)

    wcls_blk = jnp.zeros((8, SMALL_COLS), jnp.float32).at[0, :D].set(w_cls[0])
    bcls_blk = jnp.zeros((8, SMALL_COLS), jnp.float32).at[0, 0].set(b_cls[0, 0])
    small = jnp.concatenate([
        colpad(w1.reshape(K_INP * F, C_EEG)),   # rows   0.. 39
        col0(bias1),                            # rows  40.. 47
        colpad(w2),                             # rows  48.. 63
        col0(bias2),                            # rows  64.. 79
        colpad(w3),                             # rows  80.. 95
        col0(bias3),                            # rows  96..111
        wcls_blk,                               # rows 112..119
        bcls_blk,                               # rows 120..127
    ], axis=0).astype(jnp.float32)

    # ---- constant pooling + banded shift/validity matrices ------------------
    lane = np.arange(BT)
    r, c = lane[:, None], lane[None, :]

    # avg-pool 1: input lanes (b*T + t) -> compact pooled lanes (b*T1 + u)
    p1m = ((c < B * T1) & (r // T == c // T1)
           & ((r % T) // POOL_INP == c % T1)).astype(np.float32) / POOL_INP

    # avg-pool 2: compact pooled lanes -> output lanes (b*T_OUT + v)
    p2m = ((r < B * T1) & (c < N_OUT) & (r // T1 == c // T_OUT)
           & (r % T1 >= (c % T_OUT) * POOL_STRIDE)
           & (r % T1 < (c % T_OUT) * POOL_STRIDE + POOL_LEN)
           ).astype(np.float32) / POOL_LEN

    # banded shift+validity matrices: out[:, dst] = in[:, dst + k - pad] (zero pad),
    # batch-block aware so shifts never cross the batch boundary on the lane axis
    s1_mats = np.concatenate(
        [((r // T == c // T) & (r % T == (c % T) + (k - PAD_INP))
          ).astype(np.float32) for k in range(K_INP)], axis=0)
    s2_mats = np.concatenate(
        [((r < B * T1) & (c < B * T1) & (r // T1 == c // T1)
          & (r % T1 == (c % T1) + (k - PAD_FE))
          ).astype(np.float32) for k in range(K_FE)], axis=0)

    # depthwise FE weights broadcast along lanes: row (k*D + d) = w_fe1[d, k]
    wfe_rows = jnp.tile(jnp.transpose(w_fe1).reshape(K_FE * D, 1), (1, BT))

    big = jnp.concatenate([
        jnp.asarray(p1m),       # rows    0.. 127
        jnp.asarray(p2m),       # rows  128.. 255
        jnp.asarray(s1_mats),   # rows  256.. 895
        jnp.asarray(s2_mats),   # rows  896..1535
        wfe_rows,               # rows 1536..1615
    ], axis=0).astype(jnp.float32)
    assert big.shape == (BIG_ROWS, BT), big.shape
    return small, big


# --------------------------------- main ---------------------------------------
if __name__ == "__main__":
    key = jax.random.PRNGKey(0)
    kx, kp = jax.random.split(key)
    x = jax.random.normal(kx, (B, C_EEG, T), jnp.float32)
    params = make_params(kp)
    small_slab, big_slab = pack_params(params)   # one-time weight folding / packing

    out = jax.block_until_ready(basenet_forward(x, small_slab, big_slab))
    ref = jax.block_until_ready(basenet_reference(x, params))

    assert out.shape == (B, T_OUT, 1), out.shape
    assert jnp.allclose(out, ref, atol=2e-3, rtol=2e-3), (
        float(jnp.max(jnp.abs(out - ref))))
    print("KERNEL_OK")
</pallas_src>

<mosaic_0001>
module attributes {stable_mosaic.version = 11 : i64} {
  func.func @basenet_kernel(%arg0: i32, %arg1: memref<8x128xf32, #tpu.memory_space<vmem>>, %arg2: memref<128x16xf32, #tpu.memory_space<vmem>>, %arg3: memref<1616x128xf32, #tpu.memory_space<vmem>>, %arg4: memref<8x128xf32, #tpu.memory_space<vmem>>) attributes {dimension_semantics = [#tpu.dimension_semantics<arbitrary>], iteration_bounds = array<i64: 1>, scalar_prefetch = 0 : i64, scratch_operands = 0 : i64, tpu.core_type = #tpu.core_type<tc>, window_params = [{pipeline_mode = #tpu.pipeline_mode<synchronous>, transform_indices = @transform_0, window_bounds = array<i64: 8, 128>}, {pipeline_mode = #tpu.pipeline_mode<synchronous>, transform_indices = @transform_1, window_bounds = array<i64: 128, 16>}, {pipeline_mode = #tpu.pipeline_mode<synchronous>, transform_indices = @transform_2, window_bounds = array<i64: 1616, 128>}, {pipeline_mode = #tpu.pipeline_mode<synchronous>, transform_indices = @transform_3, window_bounds = array<i64: 8, 128>}]} {
    %c0 = arith.constant 0 : index
    %c0_0 = arith.constant 0 : index
    %0 = vector.load %arg1[%c0, %c0_0] : memref<8x128xf32, #tpu.memory_space<vmem>>, vector<8x128xf32>
    %c0_1 = arith.constant 0 : index
    %c0_2 = arith.constant 0 : index
    %1 = vector.load %arg2[%c0_1, %c0_2] : memref<128x16xf32, #tpu.memory_space<vmem>>, vector<8x8xf32>
    %c256 = arith.constant 256 : index
    %c0_3 = arith.constant 0 : index
    %2 = vector.load %arg3[%c256, %c0_3] : memref<1616x128xf32, #tpu.memory_space<vmem>>, vector<128x128xf32>
    %cst = arith.constant dense<0.000000e+00> : vector<8x128xf32>
    %3 = tpu.matmul %1, %0, %cst {dimension_numbers = #tpu.dot_dimension_numbers<[1], [0], [0], [1], [0, 0, 1, 1], [], []>} : vector<8x8xf32>, vector<8x128xf32>, vector<8x128xf32> -> vector<8x128xf32>
    %cst_4 = arith.constant dense<0.000000e+00> : vector<8x128xf32>
    %4 = tpu.matmul %3, %2, %cst_4 {dimension_numbers = #tpu.dot_dimension_numbers<[1], [0], [0], [1], [0, 0, 1, 1], [], []>} : vector<8x128xf32>, vector<128x128xf32>, vector<8x128xf32> -> vector<8x128xf32>
    %c8 = arith.constant 8 : index
    %c0_5 = arith.constant 0 : index
    %5 = vector.load %arg2[%c8, %c0_5] : memref<128x16xf32, #tpu.memory_space<vmem>>, vector<8x8xf32>
    %c384 = arith.constant 384 : index
    %c0_6 = arith.constant 0 : index
    %6 = vector.load %arg3[%c384, %c0_6] : memref<1616x128xf32, #tpu.memory_space<vmem>>, vector<128x128xf32>
    %cst_7 = arith.constant dense<0.000000e+00> : vector<8x128xf32>
    %7 = tpu.matmul %5, %0, %cst_7 {dimension_numbers = #tpu.dot_dimension_numbers<[1], [0], [0], [1], [0, 0, 1, 1], [], []>} : vector<8x8xf32>, vector<8x128xf32>, vector<8x128xf32> -> vector<8x128xf32>
    %cst_8 = arith.constant dense<0.000000e+00> : vector<8x128xf32>
    %8 = tpu.matmul %7, %6, %cst_8 {dimension_numbers = #tpu.dot_dimension_numbers<[1], [0], [0], [1], [0, 0, 1, 1], [], []>} : vector<8x128xf32>, vector<128x128xf32>, vector<8x128xf32> -> vector<8x128xf32>
    %9 = arith.addf %4, %8 : vector<8x128xf32>
    %c16 = arith.constant 16 : index
    %c0_9 = arith.constant 0 : index
    %10 = vector.load %arg2[%c16, %c0_9] : memref<128x16xf32, #tpu.memory_space<vmem>>, vector<8x8xf32>
    %c512 = arith.constant 512 : index
    %c0_10 = arith.constant 0 : index
    %11 = vector.load %arg3[%c512, %c0_10] : memref<1616x128xf32, #tpu.memory_space<vmem>>, vector<128x128xf32>
    %cst_11 = arith.constant dense<0.000000e+00> : vector<8x128xf32>
    %12 = tpu.matmul %10, %0, %cst_11 {dimension_numbers = #tpu.dot_dimension_numbers<[1], [0], [0], [1], [0, 0, 1, 1], [], []>} : vector<8x8xf32>, vector<8x128xf32>, vector<8x128xf32> -> vector<8x128xf32>
    %cst_12 = arith.constant dense<0.000000e+00> : vector<8x128xf32>
    %13 = tpu.matmul %12, %11, %cst_12 {dimension_numbers = #tpu.dot_dimension_numbers<[1], [0], [0], [1], [0, 0, 1, 1], [], []>} : vector<8x128xf32>, vector<128x128xf32>, vector<8x128xf32> -> vector<8x128xf32>
    %14 = arith.addf %9, %13 : vector<8x128xf32>
    %c24 = arith.constant 24 : index
    %c0_13 = arith.constant 0 : index
    %15 = vector.load %arg2[%c24, %c0_13] : memref<128x16xf32, #tpu.memory_space<vmem>>, vector<8x8xf32>
    %c640 = arith.constant 640 : index
    %c0_14 = arith.constant 0 : index
    %16 = vector.load %arg3[%c640, %c0_14] : memref<1616x128xf32, #tpu.memory_space<vmem>>, vector<128x128xf32>
    %cst_15 = arith.constant dense<0.000000e+00> : vector<8x128xf32>
    %17 = tpu.matmul %15, %0, %cst_15 {dimension_numbers = #tpu.dot_dimension_numbers<[1], [0], [0], [1], [0, 0, 1, 1], [], []>} : vector<8x8xf32>, vector<8x128xf32>, vector<8x128xf32> -> vector<8x128xf32>
    %cst_16 = arith.constant dense<0.000000e+00> : vector<8x128xf32>
    %18 = tpu.matmul %17, %16, %cst_16 {dimension_numbers = #tpu.dot_dimension_numbers<[1], [0], [0], [1], [0, 0, 1, 1], [], []>} : vector<8x128xf32>, vector<128x128xf32>, vector<8x128xf32> -> vector<8x128xf32>
    %19 = arith.addf %14, %18 : vector<8x128xf32>
    %c32 = arith.constant 32 : index
    %c0_17 = arith.constant 0 : index
    %20 = vector.load %arg2[%c32, %c0_17] : memref<128x16xf32, #tpu.memory_space<vmem>>, vector<8x8xf32>
    %c768 = arith.constant 768 : index
    %c0_18 = arith.constant 0 : index
    %21 = vector.load %arg3[%c768, %c0_18] : memref<1616x128xf32, #tpu.memory_space<vmem>>, vector<128x128xf32>
    %cst_19 = arith.constant dense<0.000000e+00> : vector<8x128xf32>
    %22 = tpu.matmul %20, %0, %cst_19 {dimension_numbers = #tpu.dot_dimension_numbers<[1], [0], [0], [1], [0, 0, 1, 1], [], []>} : vector<8x8xf32>, vector<8x128xf32>, vector<8x128xf32> -> vector<8x128xf32>
    %cst_20 = arith.constant dense<0.000000e+00> : vector<8x128xf32>
    %23 = tpu.matmul %22, %21, %cst_20 {dimension_numbers = #tpu.dot_dimension_numbers<[1], [0], [0], [1], [0, 0, 1, 1], [], []>} : vector<8x128xf32>, vector<128x128xf32>, vector<8x128xf32> -> vector<8x128xf32>
    %24 = arith.addf %19, %23 : vector<8x128xf32>
    %c40 = arith.constant 40 : index
    %c0_21 = arith.constant 0 : index
    %25 = vector.load %arg2[%c40, %c0_21] : memref<128x16xf32, #tpu.memory_space<vmem>>, vector<8x1xf32>
    %26 = vector.broadcast %25 : vector<8x1xf32> to vector<8x128xf32>
    %27 = arith.addf %24, %26 : vector<8x128xf32>
    %cst_22 = arith.constant 0.000000e+00 : f32
    %28 = vector.broadcast %cst_22 : f32 to vector<8x128xf32>
    %29 = arith.cmpf ogt, %27, %28 : vector<8x128xf32>
    %cst_23 = arith.constant 0.000000e+00 : f32
    %30 = vector.broadcast %cst_23 : f32 to vector<8x128xf32>
    %31 = arith.minimumf %27, %30 : vector<8x128xf32>
    %32 = math.exp %31 : vector<8x128xf32>
    %cst_24 = arith.constant 1.000000e+00 : f32
    %33 = vector.broadcast %cst_24 : f32 to vector<8x128xf32>
    %34 = arith.subf %32, %33 : vector<8x128xf32>
    %35 = arith.select %29, %27, %34 : vector<8x128xi1>, vector<8x128xf32>
    %c0_25 = arith.constant 0 : index
    %c0_26 = arith.constant 0 : index
    %36 = vector.load %arg3[%c0_25, %c0_26] : memref<1616x128xf32, #tpu.memory_space<vmem>>, vector<128x128xf32>
    %cst_27 = arith.constant dense<0.000000e+00> : vector<8x128xf32>
    %37 = tpu.matmul %35, %36, %cst_27 {dimension_numbers = #tpu.dot_dimension_numbers<[1], [0], [0], [1], [0, 0, 1, 1], [], []>} : vector<8x128xf32>, vector<128x128xf32>, vector<8x128xf32> -> vector<8x128xf32>
    %c48 = arith.constant 48 : index
    %c0_28 = arith.constant 0 : index
    %38 = vector.load %arg2[%c48, %c0_28] : memref<128x16xf32, #tpu.memory_space<vmem>>, vector<16x8xf32>
    %cst_29 = arith.constant dense<0.000000e+00> : vector<16x128xf32>
    %39 = tpu.matmul %38, %37, %cst_29 {dimension_numbers = #tpu.dot_dimension_numbers<[1], [0], [0], [1], [0, 0, 1, 1], [], []>} : vector<16x8xf32>, vector<8x128xf32>, vector<16x128xf32> -> vector<16x128xf32>
    %c64 = arith.constant 64 : index
    %c0_30 = arith.constant 0 : index
    %40 = vector.load %arg2[%c64, %c0_30] : memref<128x16xf32, #tpu.memory_space<vmem>>, vector<16x1xf32>
    %41 = vector.broadcast %40 : vector<16x1xf32> to vector<16x128xf32>
    %42 = arith.addf %39, %41 : vector<16x128xf32>
    %cst_31 = arith.constant 0.000000e+00 : f32
    %43 = vector.broadcast %cst_31 : f32 to vector<16x128xf32>
    %44 = arith.cmpf ogt, %42, %43 : vector<16x128xf32>
    %cst_32 = arith.constant 0.000000e+00 : f32
    %45 = vector.broadcast %cst_32 : f32 to vector<16x128xf32>
    %46 = arith.minimumf %42, %45 : vector<16x128xf32>
    %47 = math.exp %46 : vector<16x128xf32>
    %cst_33 = arith.constant 1.000000e+00 : f32
    %48 = vector.broadcast %cst_33 : f32 to vector<16x128xf32>
    %49 = arith.subf %47, %48 : vector<16x128xf32>
    %50 = arith.select %44, %42, %49 : vector<16x128xi1>, vector<16x128xf32>
    %c896 = arith.constant 896 : index
    %c0_34 = arith.constant 0 : index
    %51 = vector.load %arg3[%c896, %c0_34] : memref<1616x128xf32, #tpu.memory_space<vmem>>, vector<128x128xf32>
    %c1536 = arith.constant 1536 : index
    %c0_35 = arith.constant 0 : index
    %52 = vector.load %arg3[%c1536, %c0_35] : memref<1616x128xf32, #tpu.memory_space<vmem>>, vector<16x128xf32>
    %cst_36 = arith.constant dense<0.000000e+00> : vector<16x128xf32>
    %53 = tpu.matmul %50, %51, %cst_36 {dimension_numbers = #tpu.dot_dimension_numbers<[1], [0], [0], [1], [0, 0, 1, 1], [], []>} : vector<16x128xf32>, vector<128x128xf32>, vector<16x128xf32> -> vector<16x128xf32>
    %54 = arith.mulf %52, %53 : vector<16x128xf32>
    %c1024 = arith.constant 1024 : index
    %c0_37 = arith.constant 0 : index
    %55 = vector.load %arg3[%c1024, %c0_37] : memref<1616x128xf32, #tpu.memory_space<vmem>>, vector<128x128xf32>
    %c1552 = arith.constant 1552 : index
    %c0_38 = arith.constant 0 : index
    %56 = vector.load %arg3[%c1552, %c0_38] : memref<1616x128xf32, #tpu.memory_space<vmem>>, vector<16x128xf32>
    %cst_39 = arith.constant dense<0.000000e+00> : vector<16x128xf32>
    %57 = tpu.matmul %50, %55, %cst_39 {dimension_numbers = #tpu.dot_dimension_numbers<[1], [0], [0], [1], [0, 0, 1, 1], [], []>} : vector<16x128xf32>, vector<128x128xf32>, vector<16x128xf32> -> vector<16x128xf32>
    %58 = arith.mulf %56, %57 : vector<16x128xf32>
    %59 = arith.addf %54, %58 : vector<16x128xf32>
    %c1152 = arith.constant 1152 : index
    %c0_40 = arith.constant 0 : index
    %60 = vector.load %arg3[%c1152, %c0_40] : memref<1616x128xf32, #tpu.memory_space<vmem>>, vector<128x128xf32>
    %c1568 = arith.constant 1568 : index
    %c0_41 = arith.constant 0 : index
    %61 = vector.load %arg3[%c1568, %c0_41] : memref<1616x128xf32, #tpu.memory_space<vmem>>, vector<16x128xf32>
    %cst_42 = arith.constant dense<0.000000e+00> : vector<16x128xf32>
    %62 = tpu.matmul %50, %60, %cst_42 {dimension_numbers = #tpu.dot_dimension_numbers<[1], [0], [0], [1], [0, 0, 1, 1], [], []>} : vector<16x128xf32>, vector<128x128xf32>, vector<16x128xf32> -> vector<16x128xf32>
    %63 = arith.mulf %61, %62 : vector<16x128xf32>
    %64 = arith.addf %59, %63 : vector<16x128xf32>
    %c1280 = arith.constant 1280 : index
    %c0_43 = arith.constant 0 : index
    %65 = vector.load %arg3[%c1280, %c0_43] : memref<1616x128xf32, #tpu.memory_space<vmem>>, vector<128x128xf32>
    %c1584 = arith.constant 1584 : index
    %c0_44 = arith.constant 0 : index
    %66 = vector.load %arg3[%c1584, %c0_44] : memref<1616x128xf32, #tpu.memory_space<vmem>>, vector<16x128xf32>
    %cst_45 = arith.constant dense<0.000000e+00> : vector<16x128xf32>
    %67 = tpu.matmul %50, %65, %cst_45 {dimension_numbers = #tpu.dot_dimension_numbers<[1], [0], [0], [1], [0, 0, 1, 1], [], []>} : vector<16x128xf32>, vector<128x128xf32>, vector<16x128xf32> -> vector<16x128xf32>
    %68 = arith.mulf %66, %67 : vector<16x128xf32>
    %69 = arith.addf %64, %68 : vector<16x128xf32>
    %c1408 = arith.constant 1408 : index
    %c0_46 = arith.constant 0 : index
    %70 = vector.load %arg3[%c1408, %c0_46] : memref<1616x128xf32, #tpu.memory_space<vmem>>, vector<128x128xf32>
    %c1600 = arith.constant 1600 : index
    %c0_47 = arith.constant 0 : index
    %71 = vector.load %arg3[%c1600, %c0_47] : memref<1616x128xf32, #tpu.memory_space<vmem>>, vector<16x128xf32>
    %cst_48 = arith.constant dense<0.000000e+00> : vector<16x128xf32>
    %72 = tpu.matmul %50, %70, %cst_48 {dimension_numbers = #tpu.dot_dimension_numbers<[1], [0], [0], [1], [0, 0, 1, 1], [], []>} : vector<16x128xf32>, vector<128x128xf32>, vector<16x128xf32> -> vector<16x128xf32>
    %73 = arith.mulf %71, %72 : vector<16x128xf32>
    %74 = arith.addf %69, %73 : vector<16x128xf32>
    %c80 = arith.constant 80 : index
    %c0_49 = arith.constant 0 : index
    %75 = vector.load %arg2[%c80, %c0_49] : memref<128x16xf32, #tpu.memory_space<vmem>>, vector<16x16xf32>
    %cst_50 = arith.constant dense<0.000000e+00> : vector<16x128xf32>
    %76 = tpu.matmul %75, %74, %cst_50 {dimension_numbers = #tpu.dot_dimension_numbers<[1], [0], [0], [1], [0, 0, 1, 1], [], []>} : vector<16x16xf32>, vector<16x128xf32>, vector<16x128xf32> -> vector<16x128xf32>
    %c96 = arith.constant 96 : index
    %c0_51 = arith.constant 0 : index
    %77 = vector.load %arg2[%c96, %c0_51] : memref<128x16xf32, #tpu.memory_space<vmem>>, vector<16x1xf32>
    %78 = vector.broadcast %77 : vector<16x1xf32> to vector<16x128xf32>
    %79 = arith.addf %76, %78 : vector<16x128xf32>
    %cst_52 = arith.constant 0.000000e+00 : f32
    %80 = vector.broadcast %cst_52 : f32 to vector<16x128xf32>
    %81 = arith.cmpf ogt, %79, %80 : vector<16x128xf32>
    %cst_53 = arith.constant 0.000000e+00 : f32
    %82 = vector.broadcast %cst_53 : f32 to vector<16x128xf32>
    %83 = arith.minimumf %79, %82 : vector<16x128xf32>
    %84 = math.exp %83 : vector<16x128xf32>
    %cst_54 = arith.constant 1.000000e+00 : f32
    %85 = vector.broadcast %cst_54 : f32 to vector<16x128xf32>
    %86 = arith.subf %84, %85 : vector<16x128xf32>
    %87 = arith.select %81, %79, %86 : vector<16x128xi1>, vector<16x128xf32>
    %c112 = arith.constant 112 : index
    %c0_55 = arith.constant 0 : index
    %88 = vector.load %arg2[%c112, %c0_55] : memref<128x16xf32, #tpu.memory_space<vmem>>, vector<8x16xf32>
    %cst_56 = arith.constant dense<0.000000e+00> : vector<8x128xf32>
    %89 = tpu.matmul %88, %87, %cst_56 {dimension_numbers = #tpu.dot_dimension_numbers<[1], [0], [0], [1], [0, 0, 1, 1], [], []>} : vector<8x16xf32>, vector<16x128xf32>, vector<8x128xf32> -> vector<8x128xf32>
    %c128 = arith.constant 128 : index
    %c0_57 = arith.constant 0 : index
    %90 = vector.load %arg3[%c128, %c0_57] : memref<1616x128xf32, #tpu.memory_space<vmem>>, vector<128x128xf32>
    %cst_58 = arith.constant dense<0.000000e+00> : vector<8x128xf32>
    %91 = tpu.matmul %89, %90, %cst_58 {dimension_numbers = #tpu.dot_dimension_numbers<[1], [0], [0], [1], [0, 0, 1, 1], [], []>} : vector<8x128xf32>, vector<128x128xf32>, vector<8x128xf32> -> vector<8x128xf32>
    %c120 = arith.constant 120 : index
    %c0_59 = arith.constant 0 : index
    %92 = vector.load %arg2[%c120, %c0_59] : memref<128x16xf32, #tpu.memory_space<vmem>>, vector<1x1xf32>
    %93 = vector.broadcast %92 : vector<1x1xf32> to vector<8x128xf32>
    %94 = arith.addf %91, %93 : vector<8x128xf32>
    %c0_60 = arith.constant 0 : index
    %c0_61 = arith.constant 0 : index
    %95 = vector.load %arg4[%c0_60, %c0_61] : memref<8x128xf32, #tpu.memory_space<vmem>>, vector<8x128xf32>
    tpu.vector_store %arg4[%c0_60, %c0_61], %94 {strides = array<i32>} : memref<8x128xf32, #tpu.memory_space<vmem>>, vector<8x128xf32>,
    return
  }
  func.func @transform_0(%arg0: i32) -> (i32, i32) {
    %c0_i32 = arith.constant 0 : i32
    %c0_i32_0 = arith.constant 0 : i32
    %c0_i32_1 = arith.constant 0 : i32
    return %c0_i32, %c0_i32_0 : i32, i32
  }
  func.func @transform_1(%arg0: i32) -> (i32, i32) {
    %c0_i32 = arith.constant 0 : i32
    %c0_i32_0 = arith.constant 0 : i32
    %c0_i32_1 = arith.constant 0 : i32
    return %c0_i32, %c0_i32_0 : i32, i32
  }
  func.func @transform_2(%arg0: i32) -> (i32, i32) {
    %c0_i32 = arith.constant 0 : i32
    %c0_i32_0 = arith.constant 0 : i32
    %c0_i32_1 = arith.constant 0 : i32
    return %c0_i32, %c0_i32_0 : i32, i32
  }
  func.func @transform_3(%arg0: i32) -> (i32, i32) {
    %c0_i32 = arith.constant 0 : i32
    %c0_i32_0 = arith.constant 0 : i32
    %c0_i32_1 = arith.constant 0 : i32
    return %c0_i32, %c0_i32_0 : i32, i32
  }
}

</mosaic_0001>

<llo_original>
// kernel: squeeze.1
$region0: #{squeeze.1}
  %s0 = inlined_call_operand.vmem [shape: f32[26], index: 0, kind: input, shape index: {}]
  %s1 = inlined_call_operand.hbm [shape: f32[2,13,1], index: 1, kind: output, shape index: {}]
  $region1: #{squeeze.1} parent=0
    #allocation0 [shape = 'u8[1024]{0}', space=vmem, size = 0x400, scoped, tag = 'operand span for operand 1']
    #allocation1 [shape = 's32[1]{0}', space=sflag, size = 0x4, scoped, tag = 'scoped memory for squeeze.1']
    #allocation2 [shape = 'u8[4096]{0}', space=vmem, size = 0x1000, scoped, tag = 'scoped mem for output reshape']
    #allocation3 [shape = 'u8[4096]{0}', space=vmem, size = 0x1000, scoped, tag = 'scoped mem for input reshape']
    %2 = vsyncpa [#allocation1], 0
    %s4 = sshllo.u32 0, 1
    %v5 = vld [vmem:[%s0] sm:%s4]
    %6 = vst [vmem:[#allocation3] sm:%s4] %v5
    %v7 = vld [vmem:[#allocation3] sm:$0x1]
    %vm8 = vcmask 105472
    %9 = vst.msk [vmem:[#allocation2] sm:$0x1] %vm8, %v7
    %v10 = vld [vmem:[#allocation3] sm:$0x1]
    %11 = vrot.lane.b32.xlu0 %v10, 115
    %v12 = vpop.permute.xlu0 %11
    %vm13 = vcmask 105472
    %s14 = scalar_lea.vmem [#allocation2], 1
    %15 = vst.msk [vmem:[%s14] sm:$0x1] %vm13, %v12
    %s17 = sshllo.u32 0, 2
    %v19 = vld [vmem:[#allocation2] sm:%s17]
    %s20 = sshllo.u32 0, 2
    %21 = vst [vmem:[#allocation0] sm:%s20] %v19
    %s23 = ssub.s32 32, 32
    %24 = vsyncadd [#allocation1], %s23
    %s26 = sshll.u32 [#allocation0], 4
    %s27 = int_to_ptr.vmem [resolvable:$true] %s26
    %29 = dma.vmem_to_hbm [thread:$0]  %s27, 32, %s1, [#allocation1]
    %30 = dma.done [#allocation1], 32
    %31 = vsyncpa [#allocation1], 1

// kernel: basenet_forward.1
$region0: #{basenet_forward.1}
  #allocation0 [shape = 'u32[]', space=smem, size = 0x4, offset = 0x4, fixed_abs, tag = 'smem constant byte address 0x4 - core index']
  #allocation1 [shape = 'u32[144,128]{1,0:T(1,128)}', space=vmem, size = 0x12000, scoped, tag = 'internal scratch']
  %s0 = inlined_call_operand.vmem [shape: f32[8,128], index: 0, kind: input, shape index: {}]
  %s1 = inlined_call_operand.vmem [shape: f32[128,16], index: 1, kind: input, shape index: {}]
  %s2 = inlined_call_operand.hbm [shape: f32[1616,128], index: 2, kind: input, shape index: {}]
  %s3 = inlined_call_operand.vmem [shape: f32[8,128], index: 3, kind: output, shape index: {}]
  %s4 = sld [smem:[#allocation0]]
  $region26: #{basenet_forward.1} parent=0
    _
  %s6 = ssub.s32 1, %s4
  %s7 = scalar_select 0, %s6, %s4
  $region1: #{basenet_forward.1} parent=0
    #allocation2 [shape = 'u8[827392]{0}', space=vmem, size = 0xca000, scoped, tag = 'input window, operand 2, single buffered']
    #allocation3 [shape = 's32[1]{0}', space=sflag, size = 0x4, scoped, tag = 'scoped memory for basenet_forward.1']
    %8 = vsyncpa [#allocation3], 0
    // Predicated region
    $region2: #{basenet_forward.1} parent=1 // pred_check
      _
    $region3: #{basenet_forward.1} parent=1 // pred_check_branch
      %10 = sbr.rel (0) target = $region5
    $region4: #{basenet_forward.1} parent=1 // pred_region
      _
    $region5: #{basenet_forward.1} parent=1 // pred_fallthru
      _
    // Predicated region
    $region6: #{basenet_forward.1} parent=1 // pred_check
      _
    $region7: #{basenet_forward.1} parent=1 // pred_check_branch
      %12 = sbr.rel (0) target = $region9
    $region8: #{basenet_forward.1} parent=1 // pred_region
      _
    $region9: #{basenet_forward.1} parent=1 // pred_fallthru
      _
    // Predicated region
    $region10: #{basenet_forward.1} parent=1 // pred_check
      _
    $region11: #{basenet_forward.1} parent=1 // pred_check_branch
      %14 = sbr.rel (0) target = $region13
    $region12: #{basenet_forward.1} parent=1 // pred_region
      %s16 = ssub.s32 25856, 25856
      %17 = vsyncadd [#allocation3], %s16
      %s18 = sshll.u32 [#allocation2], 4
      %s19 = int_to_ptr.vmem [resolvable:$true] %s18
      %24 = dma.hbm_to_vmem [thread:$0]  %s2, 25856, %s19, [#allocation3], 128, 128, 8
    $region13: #{basenet_forward.1} parent=1 // pred_fallthru
      _
    // Predicated region
    $region14: #{basenet_forward.1} parent=1 // pred_check
      _
    $region15: #{basenet_forward.1} parent=1 // pred_check_branch
      %26 = sbr.rel (0) target = $region17
    $region16: #{basenet_forward.1} parent=1 // pred_region
      %27 = dma.done [#allocation3], 25856
    $region17: #{basenet_forward.1} parent=1 // pred_fallthru
      _
    %v28 = vld [vmem:[%s0] sm:$0xff]
    %v29 = vld [vmem:[%s1] sm:$0xff]
    %v30 = vld [vmem:[#allocation2 + $0x100] sm:$0xff]
    %v31 = vld [vmem:[#allocation2 + $0x108] sm:$0xff]
    %v32 = vld [vmem:[#allocation2 + $0x110] sm:$0xff]
    %v33 = vld [vmem:[#allocation2 + $0x118] sm:$0xff]
    %v34 = vld [vmem:[#allocation2 + $0x120] sm:$0xff]
    %v35 = vld [vmem:[#allocation2 + $0x128] sm:$0xff]
    %v36 = vld [vmem:[#allocation2 + $0x130] sm:$0xff]
    %v37 = vld [vmem:[#allocation2 + $0x138] sm:$0xff]
    %v38 = vld [vmem:[#allocation2 + $0x140] sm:$0xff]
    %v39 = vld [vmem:[#allocation2 + $0x148] sm:$0xff]
    %v40 = vld [vmem:[#allocation2 + $0x150] sm:$0xff]
    %v41 = vld [vmem:[#allocation2 + $0x158] sm:$0xff]
    %v42 = vld [vmem:[#allocation2 + $0x160] sm:$0xff]
    %v43 = vld [vmem:[#allocation2 + $0x168] sm:$0xff]
    %v44 = vld [vmem:[#allocation2 + $0x170] sm:$0xff]
    %v45 = vld [vmem:[#allocation2 + $0x178] sm:$0xff]
    %vm46 = vcmask 64512
    %v48 = vsel %vm46, %v29, 0
    %50 = vmatprep.subr.mxu0 0.0
    %51 = vmatpush1.msra.mxu0 %v28
    %52 = vmatprep.subr.mxu0 0.0
    %53 = vmatpush1.msra.mxu0 0.0
    %54 = vmatprep.subr.mxu0 0.0
    %55 = vmatpush1.msra.mxu0 0.0
    %56 = vmatprep.subr.mxu0 0.0
    %57 = vmatpush1.msra.mxu0 0.0
    %58 = vmatprep.subr.mxu0 0.0
    %59 = vmatpush1.msra.mxu0 0.0
    %60 = vmatprep.subr.mxu0 0.0
    %61 = vmatpush1.msra.mxu0 0.0
    %62 = vmatprep.subr.mxu0 0.0
    %63 = vmatpush1.msra.mxu0 0.0
    %64 = vmatprep.subr.mxu0 0.0
    %65 = vmatpush1.msra.mxu0 0.0
    %66 = vmatprep.subr.mxu0 0.0
    %67 = vmatpush1.msra.mxu0 0.0
    %68 = vmatprep.subr.mxu0 0.0
    %69 = vmatpush1.msra.mxu0 0.0
    %70 = vmatprep.subr.mxu0 0.0
    %71 = vmatpush1.msra.mxu0 0.0
    %72 = vmatprep.subr.mxu0 0.0
    %73 = vmatpush1.msra.mxu0 0.0
    %74 = vmatprep.subr.mxu0 0.0
    %75 = vmatpush1.msra.mxu0 0.0
    %76 = vmatprep.subr.mxu0 0.0
    %77 = vmatpush1.msra.mxu0 0.0
    %78 = vmatprep.subr.mxu0 0.0
    %79 = vmatpush1.msra.mxu0 0.0
    %80 = vmatprep.subr.mxu0 0.0
    %81 = vmatpush1.msra.mxu0 0.0
    %82 = vmatprep.subr.mxu0 0.0
    %83 = vmatpush1.msra.mxu0 0.0
    %84 = vmatprep.subr.mxu0 0.0
    %85 = vmatpush1.msra.mxu0 0.0
    %86 = vmatprep.subr.mxu0 0.0
    %87 = vmatpush1.msra.mxu0 0.0
    %88 = vmatprep.subr.mxu0 0.0
    %89 = vmatpush1.msra.mxu0 0.0
    %90 = vmatprep.subr.mxu0 0.0
    %91 = vmatpush1.msra.mxu0 0.0
    %92 = vmatprep.subr.mxu0 0.0
    %93 = vmatpush1.msra.mxu0 0.0
    %94 = vmatprep.subr.mxu0 0.0
    %95 = vmatpush1.msra.mxu0 0.0
    %96 = vmatprep.subr.mxu0 0.0
    %97 = vmatpush1.msra.mxu0 0.0
    %98 = vmatprep.subr.mxu0 0.0
    %99 = vmatpush1.msra.mxu0 0.0
    %100 = vmatprep.subr.mxu0 0.0
    %101 = vmatpush1.msra.mxu0 0.0
    %102 = vmatprep.subr.mxu0 0.0
    %103 = vmatpush1.msra.mxu0 0.0
    %104 = vmatprep.subr.mxu0 0.0
    %105 = vmatpush1.msra.mxu0 0.0
    %106 = vmatprep.subr.mxu0 0.0
    %107 = vmatpush1.msra.mxu0 0.0
    %108 = vmatprep.subr.mxu0 0.0
    %109 = vmatpush1.msra.mxu0 0.0
    %110 = vmatprep.subr.mxu0 0.0
    %111 = vmatpush1.msra.mxu0 0.0
    %112 = vmatprep.subr.mxu0 0.0
    %113 = vmatpush1.msra.mxu0 0.0
    %114 = vmatprep.mubr.f32.mxu0 0.0
    %115 = vmatmul.mubr.f32.gmra.mrb[0].mxu0 %v48
    %v116 = vpop.f32.mrb[0].mxu0
    %v117 = vadd.f32 0.0, %v116
    %v118 = vpop.f32.mrb[0].mxu0
    %119 = vdwg.mxu0
    %v120 = vld [vmem:[%s1 + $0x8] sm:$0xff]
    %v121 = vld [vmem:[#allocation2 + $0x180] sm:$0xff]
    %v122 = vld [vmem:[#allocation2 + $0x188] sm:$0xff]
    %v123 = vld [vmem:[#allocation2 + $0x190] sm:$0xff]
    %v124 = vld [vmem:[#allocation2 + $0x198] sm:$0xff]
    %v125 = vld [vmem:[#allocation2 + $0x1a0] sm:$0xff]
    %v126 = vld [vmem:[#allocation2 + $0x1a8] sm:$0xff]
    %v127 = vld [vmem:[#allocation2 + $0x1b0] sm:$0xff]
    %v128 = vld [vmem:[#allocation2 + $0x1b8] sm:$0xff]
    %v129 = vld [vmem:[#allocation2 + $0x1c0] sm:$0xff]
    %v130 = vld [vmem:[#allocation2 + $0x1c8] sm:$0xff]
    %v131 = vld [vmem:[#allocation2 + $0x1d0] sm:$0xff]
    %v132 = vld [vmem:[#allocation2 + $0x1d8] sm:$0xff]
    %v133 = vld [vmem:[#allocation2 + $0x1e0] sm:$0xff]
    %v134 = vld [vmem:[#allocation2 + $0x1e8] sm:$0xff]
    %v135 = vld [vmem:[#allocation2 + $0x1f0] sm:$0xff]
    %v136 = vld [vmem:[#allocation2 + $0x1f8] sm:$0xff]
    %v138 = vsel %vm46, %v120, 0
    %140 = vmatprep.subr.mxu0 0.0
    %141 = vmatpush1.msra.mxu0 %v28
    %142 = vmatprep.subr.mxu0 0.0
    %143 = vmatpush1.msra.mxu0 0.0
    %144 = vmatprep.subr.mxu0 0.0
    %145 = vmatpush1.msra.mxu0 0.0
    %146 = vmatprep.subr.mxu0 0.0
    %147 = vmatpush1.msra.mxu0 0.0
    %148 = vmatprep.subr.mxu0 0.0
    %149 = vmatpush1.msra.mxu0 0.0
    %150 = vmatprep.subr.mxu0 0.0
    %151 = vmatpush1.msra.mxu0 0.0
    %152 = vmatprep.subr.mxu0 0.0
    %153 = vmatpush1.msra.mxu0 0.0
    %154 = vmatprep.subr.mxu0 0.0
    %155 = vmatpush1.msra.mxu0 0.0
    %156 = vmatprep.subr.mxu0 0.0
    %157 = vmatpush1.msra.mxu0 0.0
    %158 = vmatprep.subr.mxu0 0.0
    %159 = vmatpush1.msra.mxu0 0.0
    %160 = vmatprep.subr.mxu0 0.0
    %161 = vmatpush1.msra.mxu0 0.0
    %162 = vmatprep.subr.mxu0 0.0
    %163 = vmatpush1.msra.mxu0 0.0
    %164 = vmatprep.subr.mxu0 0.0
    %165 = vmatpush1.msra.mxu0 0.0
    %166 = vmatprep.subr.mxu0 0.0
    %167 = vmatpush1.msra.mxu0 0.0
    %168 = vmatprep.subr.mxu0 0.0
    %169 = vmatpush1.msra.mxu0 0.0
    %170 = vmatprep.subr.mxu0 0.0
    %171 = vmatpush1.msra.mxu0 0.0
    %172 = vmatprep.subr.mxu0 0.0
    %173 = vmatpush1.msra.mxu0 0.0
    %174 = vmatprep.subr.mxu0 0.0
    %175 = vmatpush1.msra.mxu0 0.0
    %176 = vmatprep.subr.mxu0 0.0
    %177 = vmatpush1.msra.mxu0 0.0
    %178 = vmatprep.subr.mxu0 0.0
    %179 = vmatpush1.msra.mxu0 0.0
    %180 = vmatprep.subr.mxu0 0.0
    %181 = vmatpush1.msra.mxu0 0.0
    %182 = vmatprep.subr.mxu0 0.0
    %183 = vmatpush1.msra.mxu0 0.0
    %184 = vmatprep.subr.mxu0 0.0
    %185 = vmatpush1.msra.mxu0 0.0
    %186 = vmatprep.subr.mxu0 0.0
    %187 = vmatpush1.msra.mxu0 0.0
    %188 = vmatprep.subr.mxu0 0.0
    %189 = vmatpush1.msra.mxu0 0.0
    %190 = vmatprep.subr.mxu0 0.0
    %191 = vmatpush1.msra.mxu0 0.0
    %192 = vmatprep.subr.mxu0 0.0
    %193 = vmatpush1.msra.mxu0 0.0
    %194 = vmatprep.subr.mxu0 0.0
    %195 = vmatpush1.msra.mxu0 0.0
    %196 = vmatprep.subr.mxu0 0.0
    %197 = vmatpush1.msra.mxu0 0.0
    %198 = vmatprep.subr.mxu0 0.0
    %199 = vmatpush1.msra.mxu0 0.0
    %200 = vmatprep.subr.mxu0 0.0
    %201 = vmatpush1.msra.mxu0 0.0
    %202 = vmatprep.subr.mxu0 0.0
    %203 = vmatpush1.msra.mxu0 0.0
    %204 = vmatprep.mubr.f32.mxu0 0.0
    %205 = vmatmul.mubr.f32.gmra.mrb[0].mxu0 %v138
    %v206 = vpop.f32.mrb[0].mxu0
    %v207 = vadd.f32 0.0, %v206
    %v208 = vpop.f32.mrb[0].mxu0
    %209 = vdwg.mxu0
    %210 = vmatprep.subr.mxu0 0.0
    %211 = vmatpush1.msra.mxu0 %v121
    %212 = vmatprep.subr.mxu0 0.0
    %213 = vmatpush1.msra.mxu0 %v122
    %214 = vmatprep.subr.mxu0 0.0
    %215 = vmatpush1.msra.mxu0 %v123
    %216 = vmatprep.subr.mxu0 0.0
    %217 = vmatpush1.msra.mxu0 %v124
    %218 = vmatprep.subr.mxu0 0.0
    %219 = vmatpush1.msra.mxu0 %v125
    %220 = vmatprep.subr.mxu0 0.0
    %221 = vmatpush1.msra.mxu0 %v126
    %222 = vmatprep.subr.mxu0 0.0
    %223 = vmatpush1.msra.mxu0 %v127
    %224 = vmatprep.subr.mxu0 0.0
    %225 = vmatpush1.msra.mxu0 %v128
    %226 = vmatprep.subr.mxu0 0.0
    %227 = vmatpush1.msra.mxu0 %v129
    %228 = vmatprep.subr.mxu0 0.0
    %229 = vmatpush1.msra.mxu0 %v130
    %230 = vmatprep.subr.mxu0 0.0
    %231 = vmatpush1.msra.mxu0 %v131
    %232 = vmatprep.subr.mxu0 0.0
    %233 = vmatpush1.msra.mxu0 %v132
    %234 = vmatprep.subr.mxu0 0.0
    %235 = vmatpush1.msra.mxu0 %v133
    %236 = vmatprep.subr.mxu0 0.0
    %237 = vmatpush1.msra.mxu0 %v134
    %238 = vmatprep.subr.mxu0 0.0
    %239 = vmatpush1.msra.mxu0 %v135
    %240 = vmatprep.subr.mxu0 0.0
    %241 = vmatpush1.msra.mxu0 %v136
    %242 = vmatprep.subr.mxu0 0.0
    %243 = vmatpush1.msra.mxu0 0.0
    %244 = vmatprep.subr.mxu0 0.0
    %245 = vmatpush1.msra.mxu0 0.0
    %246 = vmatprep.subr.mxu0 0.0
    %247 = vmatpush1.msra.mxu0 0.0
    %248 = vmatprep.subr.mxu0 0.0
    %249 = vmatpush1.msra.mxu0 0.0
    %250 = vmatprep.subr.mxu0 0.0
    %251 = vmatpush1.msra.mxu0 0.0
    %252 = vmatprep.subr.mxu0 0.0
    %253 = vmatpush1.msra.mxu0 0.0
    %254 = vmatprep.subr.mxu0 0.0
    %255 = vmatpush1.msra.mxu0 0.0
    %256 = vmatprep.subr.mxu0 0.0
    %257 = vmatpush1.msra.mxu0 0.0
    %258 = vmatprep.subr.mxu0 0.0
    %259 = vmatpush1.msra.mxu0 0.0
    %260 = vmatprep.subr.mxu0 0.0
    %261 = vmatpush1.msra.mxu0 0.0
    %262 = vmatprep.subr.mxu0 0.0
    %263 = vmatpush1.msra.mxu0 0.0
    %264 = vmatprep.subr.mxu0 0.0
    %265 = vmatpush1.msra.mxu0 0.0
    %266 = vmatprep.subr.mxu0 0.0
    %267 = vmatpush1.msra.mxu0 0.0
    %268 = vmatprep.subr.mxu0 0.0
    %269 = vmatpush1.msra.mxu0 0.0
    %270 = vmatprep.subr.mxu0 0.0
    %271 = vmatpush1.msra.mxu0 0.0
    %272 = vmatprep.subr.mxu0 0.0
    %273 = vmatpush1.msra.mxu0 0.0
    %274 = vmatprep.mubr.f32.mxu0 0.0
    %275 = vmatmul.mubr.f32.gmra.mrb[0].mxu0 %v207
    %v276 = vpop.f32.mrb[0].mxu0
    %v277 = vadd.f32 0.0, %v276
    %v278 = vpop.f32.mrb[0].mxu0
    %279 = vdwg.mxu0
    %280 = vmatprep.subr.mxu0 0.0
    %281 = vmatpush1.msra.mxu0 %v30
    %282 = vmatprep.subr.mxu0 0.0
    %283 = vmatpush1.msra.mxu0 %v31
    %284 = vmatprep.subr.mxu0 0.0
    %285 = vmatpush1.msra.mxu0 %v32
    %286 = vmatprep.subr.mxu0 0.0
    %287 = vmatpush1.msra.mxu0 %v33
    %288 = vmatprep.subr.mxu0 0.0
    %289 = vmatpush1.msra.mxu0 %v34
    %290 = vmatprep.subr.mxu0 0.0
    %291 = vmatpush1.msra.mxu0 %v35
    %292 = vmatprep.subr.mxu0 0.0
    %293 = vmatpush1.msra.mxu0 %v36
    %294 = vmatprep.subr.mxu0 0.0
    %295 = vmatpush1.msra.mxu0 %v37
    %296 = vmatprep.subr.mxu0 0.0
    %297 = vmatpush1.msra.mxu0 %v38
    %298 = vmatprep.subr.mxu0 0.0
    %299 = vmatpush1.msra.mxu0 %v39
    %300 = vmatprep.subr.mxu0 0.0
    %301 = vmatpush1.msra.mxu0 %v40
    %302 = vmatprep.subr.mxu0 0.0
    %303 = vmatpush1.msra.mxu0 %v41
    %304 = vmatprep.subr.mxu0 0.0
    %305 = vmatpush1.msra.mxu0 %v42
    %306 = vmatprep.subr.mxu0 0.0
    %307 = vmatpush1.msra.mxu0 %v43
    %308 = vmatprep.subr.mxu0 0.0
    %309 = vmatpush1.msra.mxu0 %v44
    %310 = vmatprep.subr.mxu0 0.0
    %311 = vmatpush1.msra.mxu0 %v45
    %312 = vmatprep.subr.mxu0 0.0
    %313 = vmatpush1.msra.mxu0 0.0
    %314 = vmatprep.subr.mxu0 0.0
    %315 = vmatpush1.msra.mxu0 0.0
    %316 = vmatprep.subr.mxu0 0.0
    %317 = vmatpush1.msra.mxu0 0.0
    %318 = vmatprep.subr.mxu0 0.0
    %319 = vmatpush1.msra.mxu0 0.0
    %320 = vmatprep.subr.mxu0 0.0
    %321 = vmatpush1.msra.mxu0 0.0
    %322 = vmatprep.subr.mxu0 0.0
    %323 = vmatpush1.msra.mxu0 0.0
    %324 = vmatprep.subr.mxu0 0.0
    %325 = vmatpush1.msra.mxu0 0.0
    %326 = vmatprep.subr.mxu0 0.0
    %327 = vmatpush1.msra.mxu0 0.0
    %328 = vmatprep.subr.mxu0 0.0
    %329 = vmatpush1.msra.mxu0 0.0
    %330 = vmatprep.subr.mxu0 0.0
    %331 = vmatpush1.msra.mxu0 0.0
    %332 = vmatprep.subr.mxu0 0.0
    %333 = vmatpush1.msra.mxu0 0.0
    %334 = vmatprep.subr.mxu0 0.0
    %335 = vmatpush1.msra.mxu0 0.0
    %336 = vmatprep.subr.mxu0 0.0
    %337 = vmatpush1.msra.mxu0 0.0
    %338 = vmatprep.subr.mxu0 0.0
    %339 = vmatpush1.msra.mxu0 0.0
    %340 = vmatprep.subr.mxu0 0.0
    %341 = vmatpush1.msra.mxu0 0.0
    %342 = vmatprep.subr.mxu0 0.0
    %343 = vmatpush1.msra.mxu0 0.0
    %344 = vmatprep.mubr.f32.mxu0 0.0
    %345 = vmatmul.mubr.f32.gmra.mrb[0].mxu0 %v117
    %v346 = vpop.f32.mrb[0].mxu0
    %v347 = vadd.f32 %v277, %v346
    %v348 = vpop.f32.mrb[0].mxu0
    %349 = vdwg.mxu0
    %v350 = vld [vmem:[%s1 + $0x10] sm:$0xff]
    %v351 = vld [vmem:[#allocation2 + $0x200] sm:$0xff]
    %v352 = vld [vmem:[#allocation2 + $0x208] sm:$0xff]
    %v353 = vld [vmem:[#allocation2 + $0x210] sm:$0xff]
    %v354 = vld [vmem:[#allocation2 + $0x218] sm:$0xff]
    %v355 = vld [vmem:[#allocation2 + $0x220] sm:$0xff]
    %v356 = vld [vmem:[#allocation2 + $0x228] sm:$0xff]
    %v357 = vld [vmem:[#allocation2 + $0x230] sm:$0xff]
    %v358 = vld [vmem:[#allocation2 + $0x238] sm:$0xff]
    %v359 = vld [vmem:[#allocation2 + $0x240] sm:$0xff]
    %v360 = vld [vmem:[#allocation2 + $0x248] sm:$0xff]
    %v361 = vld [vmem:[#allocation2 + $0x250] sm:$0xff]
    %v362 = vld [vmem:[#allocation2 + $0x258] sm:$0xff]
    %v363 = vld [vmem:[#allocation2 + $0x260] sm:$0xff]
    %v364 = vld [vmem:[#allocation2 + $0x268] sm:$0xff]
    %v365 = vld [vmem:[#allocation2 + $0x270] sm:$0xff]
    %v366 = vld [vmem:[#allocation2 + $0x278] sm:$0xff]
    %v368 = vsel %vm46, %v350, 0
    %370 = vmatprep.subr.mxu0 0.0
    %371 = vmatpush1.msra.mxu0 %v28
    %372 = vmatprep.subr.mxu0 0.0
    %373 = vmatpush1.msra.mxu0 0.0
    %374 = vmatprep.subr.mxu0 0.0
    %375 = vmatpush1.msra.mxu0 0.0
    %376 = vmatprep.subr.mxu0 0.0
    %377 = vmatpush1.msra.mxu0 0.0
    %378 = vmatprep.subr.mxu0 0.0
    %379 = vmatpush1.msra.mxu0 0.0
    %380 = vmatprep.subr.mxu0 0.0
    %381 = vmatpush1.msra.mxu0 0.0
    %382 = vmatprep.subr.mxu0 0.0
    %383 = vmatpush1.msra.mxu0 0.0
    %384 = vmatprep.subr.mxu0 0.0
    %385 = vmatpush1.msra.mxu0 0.0
    %386 = vmatprep.subr.mxu0 0.0
    %387 = vmatpush1.msra.mxu0 0.0
    %388 = vmatprep.subr.mxu0 0.0
    %389 = vmatpush1.msra.mxu0 0.0
    %390 = vmatprep.subr.mxu0 0.0
    %391 = vmatpush1.msra.mxu0 0.0
    %392 = vmatprep.subr.mxu0 0.0
    %393 = vmatpush1.msra.mxu0 0.0
    %394 = vmatprep.subr.mxu0 0.0
    %395 = vmatpush1.msra.mxu0 0.0
    %396 = vmatprep.subr.mxu0 0.0
    %397 = vmatpush1.msra.mxu0 0.0
    %398 = vmatprep.subr.mxu0 0.0
    %399 = vmatpush1.msra.mxu0 0.0
    %400 = vmatprep.subr.mxu0 0.0
    %401 = vmatpush1.msra.mxu0 0.0
    %402 = vmatprep.subr.mxu0 0.0
    %403 = vmatpush1.msra.mxu0 0.0
    %404 = vmatprep.subr.mxu0 0.0
    %405 = vmatpush1.msra.mxu0 0.0
    %406 = vmatprep.subr.mxu0 0.0
    %407 = vmatpush1.msra.mxu0 0.0
    %408 = vmatprep.subr.mxu0 0.0
    %409 = vmatpush1.msra.mxu0 0.0
    %410 = vmatprep.subr.mxu0 0.0
    %411 = vmatpush1.msra.mxu0 0.0
    %412 = vmatprep.subr.mxu0 0.0
    %413 = vmatpush1.msra.mxu0 0.0
    %414 = vmatprep.subr.mxu0 0.0
    %415 = vmatpush1.msra.mxu0 0.0
    %416 = vmatprep.subr.mxu0 0.0
    %417 = vmatpush1.msra.mxu0 0.0
    %418 = vmatprep.subr.mxu0 0.0
    %419 = vmatpush1.msra.mxu0 0.0
    %420 = vmatprep.subr.mxu0 0.0
    %421 = vmatpush1.msra.mxu0 0.0
    %422 = vmatprep.subr.mxu0 0.0
    %423 = vmatpush1.msra.mxu0 0.0
    %424 = vmatprep.subr.mxu0 0.0
    %425 = vmatpush1.msra.mxu0 0.0
    %426 = vmatprep.subr.mxu0 0.0
    %427 = vmatpush1.msra.mxu0 0.0
    %428 = vmatprep.subr.mxu0 0.0
    %429 = vmatpush1.msra.mxu0 0.0
    %430 = vmatprep.subr.mxu0 0.0
    %431 = vmatpush1.msra.mxu0 0.0
    %432 = vmatprep.subr.mxu0 0.0
    %433 = vmatpush1.msra.mxu0 0.0
    %434 = vmatprep.mubr.f32.mxu0 0.0
    %435 = vmatmul.mubr.f32.gmra.mrb[0].mxu0 %v368
    %v436 = vpop.f32.mrb[0].mxu0
    %v437 = vadd.f32 0.0, %v436
    %v438 = vpop.f32.mrb[0].mxu0
    %439 = vdwg.mxu0
    %440 = vmatprep.subr.mxu0 0.0
    %441 = vmatpush1.msra.mxu0 %v351
    %442 = vmatprep.subr.mxu0 0.0
    %443 = vmatpush1.msra.mxu0 %v352
    %444 = vmatprep.subr.mxu0 0.0
    %445 = vmatpush1.msra.mxu0 %v353
    %446 = vmatprep.subr.mxu0 0.0
    %447 = vmatpush1.msra.mxu0 %v354
    %448 = vmatprep.subr.mxu0 0.0
    %449 = vmatpush1.msra.mxu0 %v355
    %450 = vmatprep.subr.mxu0 0.0
    %451 = vmatpush1.msra.mxu0 %v356
    %452 = vmatprep.subr.mxu0 0.0
    %453 = vmatpush1.msra.mxu0 %v357
    %454 = vmatprep.subr.mxu0 0.0
    %455 = vmatpush1.msra.mxu0 %v358
    %456 = vmatprep.subr.mxu0 0.0
    %457 = vmatpush1.msra.mxu0 %v359
    %458 = vmatprep.subr.mxu0 0.0
    %459 = vmatpush1.msra.mxu0 %v360
    %460 = vmatprep.subr.mxu0 0.0
    %461 = vmatpush1.msra.mxu0 %v361
    %462 = vmatprep.subr.mxu0 0.0
    %463 = vmatpush1.msra.mxu0 %v362
    %464 = vmatprep.subr.mxu0 0.0
    %465 = vmatpush1.msra.mxu0 %v363
    %466 = vmatprep.subr.mxu0 0.0
    %467 = vmatpush1.msra.mxu0 %v364
    %468 = vmatprep.subr.mxu0 0.0
    %469 = vmatpush1.msra.mxu0 %v365
    %470 = vmatprep.subr.mxu0 0.0
    %471 = vmatpush1.msra.mxu0 %v366
    %472 = vmatprep.subr.mxu0 0.0
    %473 = vmatpush1.msra.mxu0 0.0
    %474 = vmatprep.subr.mxu0 0.0
    %475 = vmatpush1.msra.mxu0 0.0
    %476 = vmatprep.subr.mxu0 0.0
    %477 = vmatpush1.msra.mxu0 0.0
    %478 = vmatprep.subr.mxu0 0.0
    %479 = vmatpush1.msra.mxu0 0.0
    %480 = vmatprep.subr.mxu0 0.0
    %481 = vmatpush1.msra.mxu0 0.0
    %482 = vmatprep.subr.mxu0 0.0
    %483 = vmatpush1.msra.mxu0 0.0
    %484 = vmatprep.subr.mxu0 0.0
    %485 = vmatpush1.msra.mxu0 0.0
    %486 = vmatprep.subr.mxu0 0.0
    %487 = vmatpush1.msra.mxu0 0.0
    %488 = vmatprep.subr.mxu0 0.0
    %489 = vmatpush1.msra.mxu0 0.0
    %490 = vmatprep.subr.mxu0 0.0
    %491 = vmatpush1.msra.mxu0 0.0
    %492 = vmatprep.subr.mxu0 0.0
    %493 = vmatpush1.msra.mxu0 0.0
    %494 = vmatprep.subr.mxu0 0.0
    %495 = vmatpush1.msra.mxu0 0.0
    %496 = vmatprep.subr.mxu0 0.0
    %497 = vmatpush1.msra.mxu0 0.0
    %498 = vmatprep.subr.mxu0 0.0
    %499 = vmatpush1.msra.mxu0 0.0
    %500 = vmatprep.subr.mxu0 0.0
    %501 = vmatpush1.msra.mxu0 0.0
    %502 = vmatprep.subr.mxu0 0.0
    %503 = vmatpush1.msra.mxu0 0.0
    %504 = vmatprep.mubr.f32.mxu0 0.0
    %505 = vmatmul.mubr.f32.gmra.mrb[0].mxu0 %v437
    %v506 = vpop.f32.mrb[0].mxu0
    %v507 = vadd.f32 0.0, %v506
    %v508 = vpop.f32.mrb[0].mxu0
    %509 = vdwg.mxu0
    %v510 = vadd.f32 %v347, %v507
    %v511 = vld [vmem:[%s1 + $0x18] sm:$0xff]
    %v512 = vld [vmem:[#allocation2 + $0x280] sm:$0xff]
    %v513 = vld [vmem:[#allocation2 + $0x288] sm:$0xff]
    %v514 = vld [vmem:[#allocation2 + $0x290] sm:$0xff]
    %v515 = vld [vmem:[#allocation2 + $0x298] sm:$0xff]
    %v516 = vld [vmem:[#allocation2 + $0x2a0] sm:$0xff]
    %v517 = vld [vmem:[#allocation2 + $0x2a8] sm:$0xff]
    %v518 = vld [vmem:[#allocation2 + $0x2b0] sm:$0xff]
    %v519 = vld [vmem:[#allocation2 + $0x2b8] sm:$0xff]
    %v520 = vld [vmem:[#allocation2 + $0x2c0] sm:$0xff]
    %v521 = vld [vmem:[#allocation2 + $0x2c8] sm:$0xff]
    %v522 = vld [vmem:[#allocation2 + $0x2d0] sm:$0xff]
    %v523 = vld [vmem:[#allocation2 + $0x2d8] sm:$0xff]
    %v524 = vld [vmem:[#allocation2 + $0x2e0] sm:$0xff]
    %v525 = vld [vmem:[#allocation2 + $0x2e8] sm:$0xff]
    %v526 = vld [vmem:[#allocation2 + $0x2f0] sm:$0xff]
    %v527 = vld [vmem:[#allocation2 + $0x2f8] sm:$0xff]
    %v529 = vsel %vm46, %v511, 0
    %531 = vmatprep.subr.mxu0 0.0
    %532 = vmatpush1.msra.mxu0 %v28
    %533 = vmatprep.subr.mxu0 0.0
    %534 = vmatpush1.msra.mxu0 0.0
    %535 = vmatprep.subr.mxu0 0.0
    %536 = vmatpush1.msra.mxu0 0.0
    %537 = vmatprep.subr.mxu0 0.0
    %538 = vmatpush1.msra.mxu0 0.0
    %539 = vmatprep.subr.mxu0 0.0
    %540 = vmatpush1.msra.mxu0 0.0
    %541 = vmatprep.subr.mxu0 0.0
    %542 = vmatpush1.msra.mxu0 0.0
    %543 = vmatprep.subr.mxu0 0.0
    %544 = vmatpush1.msra.mxu0 0.0
    %545 = vmatprep.subr.mxu0 0.0
    %546 = vmatpush1.msra.mxu0 0.0
    %547 = vmatprep.subr.mxu0 0.0
    %548 = vmatpush1.msra.mxu0 0.0
    %549 = vmatprep.subr.mxu0 0.0
    %550 = vmatpush1.msra.mxu0 0.0
    %551 = vmatprep.subr.mxu0 0.0
    %552 = vmatpush1.msra.mxu0 0.0
    %553 = vmatprep.subr.mxu0 0.0
    %554 = vmatpush1.msra.mxu0 0.0
    %555 = vmatprep.subr.mxu0 0.0
    %556 = vmatpush1.msra.mxu0 0.0
    %557 = vmatprep.subr.mxu0 0.0
    %558 = vmatpush1.msra.mxu0 0.0
    %559 = vmatprep.subr.mxu0 0.0
    %560 = vmatpush1.msra.mxu0 0.0
    %561 = vmatprep.subr.mxu0 0.0
    %562 = vmatpush1.msra.mxu0 0.0
    %563 = vmatprep.subr.mxu0 0.0
    %564 = vmatpush1.msra.mxu0 0.0
    %565 = vmatprep.subr.mxu0 0.0
    %566 = vmatpush1.msra.mxu0 0.0
    %567 = vmatprep.subr.mxu0 0.0
    %568 = vmatpush1.msra.mxu0 0.0
    %569 = vmatprep.subr.mxu0 0.0
    %570 = vmatpush1.msra.mxu0 0.0
    %571 = vmatprep.subr.mxu0 0.0
    %572 = vmatpush1.msra.mxu0 0.0
    %573 = vmatprep.subr.mxu0 0.0
    %574 = vmatpush1.msra.mxu0 0.0
    %575 = vmatprep.subr.mxu0 0.0
    %576 = vmatpush1.msra.mxu0 0.0
    %577 = vmatprep.subr.mxu0 0.0
    %578 = vmatpush1.msra.mxu0 0.0
    %579 = vmatprep.subr.mxu0 0.0
    %580 = vmatpush1.msra.mxu0 0.0
    %581 = vmatprep.subr.mxu0 0.0
    %582 = vmatpush1.msra.mxu0 0.0
    %583 = vmatprep.subr.mxu0 0.0
    %584 = vmatpush1.msra.mxu0 0.0
    %585 = vmatprep.subr.mxu0 0.0
    %586 = vmatpush1.msra.mxu0 0.0
    %587 = vmatprep.subr.mxu0 0.0
    %588 = vmatpush1.msra.mxu0 0.0
    %589 = vmatprep.subr.mxu0 0.0
    %590 = vmatpush1.msra.mxu0 0.0
    %591 = vmatprep.subr.mxu0 0.0
    %592 = vmatpush1.msra.mxu0 0.0
    %593 = vmatprep.subr.mxu0 0.0
    %594 = vmatpush1.msra.mxu0 0.0
    %595 = vmatprep.mubr.f32.mxu0 0.0
    %596 = vmatmul.mubr.f32.gmra.mrb[0].mxu0 %v529
    %v597 = vpop.f32.mrb[0].mxu0
    %v598 = vadd.f32 0.0, %v597
    %v599 = vpop.f32.mrb[0].mxu0
    %600 = vdwg.mxu0
    %601 = vmatprep.subr.mxu0 0.0
    %602 = vmatpush1.msra.mxu0 %v512
    %603 = vmatprep.subr.mxu0 0.0
    %604 = vmatpush1.msra.mxu0 %v513
    %605 = vmatprep.subr.mxu0 0.0
    %606 = vmatpush1.msra.mxu0 %v514
    %607 = vmatprep.subr.mxu0 0.0
    %608 = vmatpush1.msra.mxu0 %v515
    %609 = vmatprep.subr.mxu0 0.0
    %610 = vmatpush1.msra.mxu0 %v516
    %611 = vmatprep.subr.mxu0 0.0
    %612 = vmatpush1.msra.mxu0 %v517
    %613 = vmatprep.subr.mxu0 0.0
    %614 = vmatpush1.msra.mxu0 %v518
    %615 = vmatprep.subr.mxu0 0.0
    %616 = vmatpush1.msra.mxu0 %v519
    %617 = vmatprep.subr.mxu0 0.0
    %618 = vmatpush1.msra.mxu0 %v520
    %619 = vmatprep.subr.mxu0 0.0
    %620 = vmatpush1.msra.mxu0 %v521
    %621 = vmatprep.subr.mxu0 0.0
    %622 = vmatpush1.msra.mxu0 %v522
    %623 = vmatprep.subr.mxu0 0.0
    %624 = vmatpush1.msra.mxu0 %v523
    %625 = vmatprep.subr.mxu0 0.0
    %626 = vmatpush1.msra.mxu0 %v524
    %627 = vmatprep.subr.mxu0 0.0
    %628 = vmatpush1.msra.mxu0 %v525
    %629 = vmatprep.subr.mxu0 0.0
    %630 = vmatpush1.msra.mxu0 %v526
    %631 = vmatprep.subr.mxu0 0.0
    %632 = vmatpush1.msra.mxu0 %v527
    %633 = vmatprep.subr.mxu0 0.0
    %634 = vmatpush1.msra.mxu0 0.0
    %635 = vmatprep.subr.mxu0 0.0
    %636 = vmatpush1.msra.mxu0 0.0
    %637 = vmatprep.subr.mxu0 0.0
    %638 = vmatpush1.msra.mxu0 0.0
    %639 = vmatprep.subr.mxu0 0.0
    %640 = vmatpush1.msra.mxu0 0.0
    %641 = vmatprep.subr.mxu0 0.0
    %642 = vmatpush1.msra.mxu0 0.0
    %643 = vmatprep.subr.mxu0 0.0
    %644 = vmatpush1.msra.mxu0 0.0
    %645 = vmatprep.subr.mxu0 0.0
    %646 = vmatpush1.msra.mxu0 0.0
    %647 = vmatprep.subr.mxu0 0.0
    %648 = vmatpush1.msra.mxu0 0.0
    %649 = vmatprep.subr.mxu0 0.0
    %650 = vmatpush1.msra.mxu0 0.0
    %651 = vmatprep.subr.mxu0 0.0
    %652 = vmatpush1.msra.mxu0 0.0
    %653 = vmatprep.subr.mxu0 0.0
    %654 = vmatpush1.msra.mxu0 0.0
    %655 = vmatprep.subr.mxu0 0.0
    %656 = vmatpush1.msra.mxu0 0.0
    %657 = vmatprep.subr.mxu0 0.0
    %658 = vmatpush1.msra.mxu0 0.0
    %659 = vmatprep.subr.mxu0 0.0
    %660 = vmatpush1.msra.mxu0 0.0
    %661 = vmatprep.subr.mxu0 0.0
    %662 = vmatpush1.msra.mxu0 0.0
    %663 = vmatprep.subr.mxu0 0.0
    %664 = vmatpush1.msra.mxu0 0.0
    %665 = vmatprep.mubr.f32.mxu0 0.0
    %666 = vmatmul.mubr.f32.gmra.mrb[0].mxu0 %v598
    %v667 = vpop.f32.mrb[0].mxu0
    %v668 = vadd.f32 0.0, %v667
    %v669 = vpop.f32.mrb[0].mxu0
    %670 = vdwg.mxu0
    %v671 = vadd.f32 %v510, %v668
    %v672 = vld [vmem:[%s1 + $0x20] sm:$0xff]
    %v673 = vld [vmem:[#allocation2 + $0x300] sm:$0xff]
    %v674 = vld [vmem:[#allocation2 + $0x308] sm:$0xff]
    %v675 = vld [vmem:[#allocation2 + $0x310] sm:$0xff]
    %v676 = vld [vmem:[#allocation2 + $0x318] sm:$0xff]
    %v677 = vld [vmem:[#allocation2 + $0x320] sm:$0xff]
    %v678 = vld [vmem:[#allocation2 + $0x328] sm:$0xff]
    %v679 = vld [vmem:[#allocation2 + $0x330] sm:$0xff]
    %v680 = vld [vmem:[#allocation2 + $0x338] sm:$0xff]
    %v681 = vld [vmem:[#allocation2 + $0x340] sm:$0xff]
    %v682 = vld [vmem:[#allocation2 + $0x348] sm:$0xff]
    %v683 = vld [vmem:[#allocation2 + $0x350] sm:$0xff]
    %v684 = vld [vmem:[#allocation2 + $0x358] sm:$0xff]
    %v685 = vld [vmem:[#allocation2 + $0x360] sm:$0xff]
    %v686 = vld [vmem:[#allocation2 + $0x368] sm:$0xff]
    %v687 = vld [vmem:[#allocation2 + $0x370] sm:$0xff]
    %v688 = vld [vmem:[#allocation2 + $0x378] sm:$0xff]
    %v690 = vsel %vm46, %v672, 0
    %692 = vmatprep.subr.mxu0 0.0
    %693 = vmatpush1.msra.mxu0 %v28
    %694 = vmatprep.subr.mxu0 0.0
    %695 = vmatpush1.msra.mxu0 0.0
    %696 = vmatprep.subr.mxu0 0.0
    %697 = vmatpush1.msra.mxu0 0.0
    %698 = vmatprep.subr.mxu0 0.0
    %699 = vmatpush1.msra.mxu0 0.0
    %700 = vmatprep.subr.mxu0 0.0
    %701 = vmatpush1.msra.mxu0 0.0
    %702 = vmatprep.subr.mxu0 0.0
    %703 = vmatpush1.msra.mxu0 0.0
    %704 = vmatprep.subr.mxu0 0.0
    %705 = vmatpush1.msra.mxu0 0.0
    %706 = vmatprep.subr.mxu0 0.0
    %707 = vmatpush1.msra.mxu0 0.0
    %708 = vmatprep.subr.mxu0 0.0
    %709 = vmatpush1.msra.mxu0 0.0
    %710 = vmatprep.subr.mxu0 0.0
    %711 = vmatpush1.msra.mxu0 0.0
    %712 = vmatprep.subr.mxu0 0.0
    %713 = vmatpush1.msra.mxu0 0.0
    %714 = vmatprep.subr.mxu0 0.0
    %715 = vmatpush1.msra.mxu0 0.0
    %716 = vmatprep.subr.mxu0 0.0
    %717 = vmatpush1.msra.mxu0 0.0
    %718 = vmatprep.subr.mxu0 0.0
    %719 = vmatpush1.msra.mxu0 0.0
    %720 = vmatprep.subr.mxu0 0.0
    %721 = vmatpush1.msra.mxu0 0.0
    %722 = vmatprep.subr.mxu0 0.0
    %723 = vmatpush1.msra.mxu0 0.0
    %724 = vmatprep.subr.mxu0 0.0
    %725 = vmatpush1.msra.mxu0 0.0
    %726 = vmatprep.subr.mxu0 0.0
    %727 = vmatpush1.msra.mxu0 0.0
    %728 = vmatprep.subr.mxu0 0.0
    %729 = vmatpush1.msra.mxu0 0.0
    %730 = vmatprep.subr.mxu0 0.0
    %731 = vmatpush1.msra.mxu0 0.0
    %732 = vmatprep.subr.mxu0 0.0
    %733 = vmatpush1.msra.mxu0 0.0
    %734 = vmatprep.subr.mxu0 0.0
    %735 = vmatpush1.msra.mxu0 0.0
    %736 = vmatprep.subr.mxu0 0.0
    %737 = vmatpush1.msra.mxu0 0.0
    %738 = vmatprep.subr.mxu0 0.0
    %739 = vmatpush1.msra.mxu0 0.0
    %740 = vmatprep.subr.mxu0 0.0
    %741 = vmatpush1.msra.mxu0 0.0
    %742 = vmatprep.subr.mxu0 0.0
    %743 = vmatpush1.msra.mxu0 0.0
    %744 = vmatprep.subr.mxu0 0.0
    %745 = vmatpush1.msra.mxu0 0.0
    %746 = vmatprep.subr.mxu0 0.0
    %747 = vmatpush1.msra.mxu0 0.0
    %748 = vmatprep.subr.mxu0 0.0
    %749 = vmatpush1.msra.mxu0 0.0
    %750 = vmatprep.subr.mxu0 0.0
    %751 = vmatpush1.msra.mxu0 0.0
    %752 = vmatprep.subr.mxu0 0.0
    %753 = vmatpush1.msra.mxu0 0.0
    %754 = vmatprep.subr.mxu0 0.0
    %755 = vmatpush1.msra.mxu0 0.0
    %756 = vmatprep.mubr.f32.mxu0 0.0
    %757 = vmatmul.mubr.f32.gmra.mrb[0].mxu0 %v690
    %v758 = vpop.f32.mrb[0].mxu0
    %v759 = vadd.f32 0.0, %v758
    %v760 = vpop.f32.mrb[0].mxu0
    %761 = vdwg.mxu0
    %762 = vmatprep.subr.mxu0 0.0
    %763 = vmatpush1.msra.mxu0 %v673
    %764 = vmatprep.subr.mxu0 0.0
    %765 = vmatpush1.msra.mxu0 %v674
    %766 = vmatprep.subr.mxu0 0.0
    %767 = vmatpush1.msra.mxu0 %v675
    %768 = vmatprep.subr.mxu0 0.0
    %769 = vmatpush1.msra.mxu0 %v676
    %770 = vmatprep.subr.mxu0 0.0
    %771 = vmatpush1.msra.mxu0 %v677
    %772 = vmatprep.subr.mxu0 0.0
    %773 = vmatpush1.msra.mxu0 %v678
    %774 = vmatprep.subr.mxu0 0.0
    %775 = vmatpush1.msra.mxu0 %v679
    %776 = vmatprep.subr.mxu0 0.0
    %777 = vmatpush1.msra.mxu0 %v680
    %778 = vmatprep.subr.mxu0 0.0
    %779 = vmatpush1.msra.mxu0 %v681
    %780 = vmatprep.subr.mxu0 0.0
    %781 = vmatpush1.msra.mxu0 %v682
    %782 = vmatprep.subr.mxu0 0.0
    %783 = vmatpush1.msra.mxu0 %v683
    %784 = vmatprep.subr.mxu0 0.0
    %785 = vmatpush1.msra.mxu0 %v684
    %786 = vmatprep.subr.mxu0 0.0
    %787 = vmatpush1.msra.mxu0 %v685
    %788 = vmatprep.subr.mxu0 0.0
    %789 = vmatpush1.msra.mxu0 %v686
    %790 = vmatprep.subr.mxu0 0.0
    %791 = vmatpush1.msra.mxu0 %v687
    %792 = vmatprep.subr.mxu0 0.0
    %793 = vmatpush1.msra.mxu0 %v688
    %794 = vmatprep.subr.mxu0 0.0
    %795 = vmatpush1.msra.mxu0 0.0
    %796 = vmatprep.subr.mxu0 0.0
    %797 = vmatpush1.msra.mxu0 0.0
    %798 = vmatprep.subr.mxu0 0.0
    %799 = vmatpush1.msra.mxu0 0.0
    %800 = vmatprep.subr.mxu0 0.0
    %801 = vmatpush1.msra.mxu0 0.0
    %802 = vmatprep.subr.mxu0 0.0
    %803 = vmatpush1.msra.mxu0 0.0
    %804 = vmatprep.subr.mxu0 0.0
    %805 = vmatpush1.msra.mxu0 0.0
    %806 = vmatprep.subr.mxu0 0.0
    %807 = vmatpush1.msra.mxu0 0.0
    %808 = vmatprep.subr.mxu0 0.0
    %809 = vmatpush1.msra.mxu0 0.0
    %810 = vmatprep.subr.mxu0 0.0
    %811 = vmatpush1.msra.mxu0 0.0
    %812 = vmatprep.subr.mxu0 0.0
    %813 = vmatpush1.msra.mxu0 0.0
    %814 = vmatprep.subr.mxu0 0.0
    %815 = vmatpush1.msra.mxu0 0.0
    %816 = vmatprep.subr.mxu0 0.0
    %817 = vmatpush1.msra.mxu0 0.0
    %818 = vmatprep.subr.mxu0 0.0
    %819 = vmatpush1.msra.mxu0 0.0
    %820 = vmatprep.subr.mxu0 0.0
    %821 = vmatpush1.msra.mxu0 0.0
    %822 = vmatprep.subr.mxu0 0.0
    %823 = vmatpush1.msra.mxu0 0.0
    %824 = vmatprep.subr.mxu0 0.0
    %825 = vmatpush1.msra.mxu0 0.0
    %826 = vmatprep.mubr.f32.mxu0 0.0
    %827 = vmatmul.mubr.f32.gmra.mrb[0].mxu0 %v759
    %v828 = vpop.f32.mrb[0].mxu0
    %v829 = vadd.f32 0.0, %v828
    %v830 = vpop.f32.mrb[0].mxu0
    %831 = vdwg.mxu0
    %v832 = vadd.f32 %v671, %v829
    %v833 = vld [vmem:[%s1 + $0x28] sm:$0xff]
    %835 = vset.pattern.permute.xlu0 0
    %836 = vperm.xlu0 %835, %v833
    %v837 = vpop.permute.xlu0 %836
    %v839 = vadd.f32 %v832, %v837
    %vm840 = vcmp.gt.f32.partialorder %v839, 0.0
    %v841 = vmin.f32 %v839, 0.0
    %v842 = vmul.f32 %v841, 1.442695
    %v843 = vpow.pop %v842
    %v844 = vsub.f32 %v843, 1.0
    %v845 = vsel %vm840, %v839, %v844
    %v846 = vld [vmem:[#allocation2] sm:$0xff]
    %v847 = vld [vmem:[#allocation2 + $0x8] sm:$0xff]
    %v848 = vld [vmem:[#allocation2 + $0x10] sm:$0xff]
    %v849 = vld [vmem:[#allocation2 + $0x18] sm:$0xff]
    %v850 = vld [vmem:[#allocation2 + $0x20] sm:$0xff]
    %v851 = vld [vmem:[#allocation2 + $0x28] sm:$0xff]
    %v852 = vld [vmem:[#allocation2 + $0x30] sm:$0xff]
    %v853 = vld [vmem:[#allocation2 + $0x38] sm:$0xff]
    %v854 = vld [vmem:[#allocation2 + $0x40] sm:$0xff]
    %v855 = vld [vmem:[#allocation2 + $0x48] sm:$0xff]
    %v856 = vld [vmem:[#allocation2 + $0x50] sm:$0xff]
    %v857 = vld [vmem:[#allocation2 + $0x58] sm:$0xff]
    %v858 = vld [vmem:[#allocation2 + $0x60] sm:$0xff]
    %v859 = vld [vmem:[#allocation2 + $0x68] sm:$0xff]
    %v860 = vld [vmem:[#allocation2 + $0x70] sm:$0xff]
    %v861 = vld [vmem:[#allocation2 + $0x78] sm:$0xff]
    %862 = vmatprep.subr.mxu0 0.0
    %863 = vmatpush1.msra.mxu0 %v846
    %864 = vmatprep.subr.mxu0 0.0
    %865 = vmatpush1.msra.mxu0 %v847
    %866 = vmatprep.subr.mxu0 0.0
    %867 = vmatpush1.msra.mxu0 %v848
    %868 = vmatprep.subr.mxu0 0.0
    %869 = vmatpush1.msra.mxu0 %v849
    %870 = vmatprep.subr.mxu0 0.0
    %871 = vmatpush1.msra.mxu0 %v850
    %872 = vmatprep.subr.mxu0 0.0
    %873 = vmatpush1.msra.mxu0 %v851
    %874 = vmatprep.subr.mxu0 0.0
    %875 = vmatpush1.msra.mxu0 %v852
    %876 = vmatprep.subr.mxu0 0.0
    %877 = vmatpush1.msra.mxu0 %v853
    %878 = vmatprep.subr.mxu0 0.0
    %879 = vmatpush1.msra.mxu0 %v854
    %880 = vmatprep.subr.mxu0 0.0
    %881 = vmatpush1.msra.mxu0 %v855
    %882 = vmatprep.subr.mxu0 0.0
    %883 = vmatpush1.msra.mxu0 %v856
    %884 = vmatprep.subr.mxu0 0.0
    %885 = vmatpush1.msra.mxu0 %v857
    %886 = vmatprep.subr.mxu0 0.0
    %887 = vmatpush1.msra.mxu0 %v858
    %888 = vmatprep.subr.mxu0 0.0
    %889 = vmatpush1.msra.mxu0 %v859
    %890 = vmatprep.subr.mxu0 0.0
    %891 = vmatpush1.msra.mxu0 %v860
    %892 = vmatprep.subr.mxu0 0.0
    %893 = vmatpush1.msra.mxu0 %v861
    %894 = vmatprep.subr.mxu0 0.0
    %895 = vmatpush1.msra.mxu0 0.0
    %896 = vmatprep.subr.mxu0 0.0
    %897 = vmatpush1.msra.mxu0 0.0
    %898 = vmatprep.subr.mxu0 0.0
    %899 = vmatpush1.msra.mxu0 0.0
    %900 = vmatprep.subr.mxu0 0.0
    %901 = vmatpush1.msra.mxu0 0.0
    %902 = vmatprep.subr.mxu0 0.0
    %903 = vmatpush1.msra.mxu0 0.0
    %904 = vmatprep.subr.mxu0 0.0
    %905 = vmatpush1.msra.mxu0 0.0
    %906 = vmatprep.subr.mxu0 0.0
    %907 = vmatpush1.msra.mxu0 0.0
    %908 = vmatprep.subr.mxu0 0.0
    %909 = vmatpush1.msra.mxu0 0.0
    %910 = vmatprep.subr.mxu0 0.0
    %911 = vmatpush1.msra.mxu0 0.0
    %912 = vmatprep.subr.mxu0 0.0
    %913 = vmatpush1.msra.mxu0 0.0
    %914 = vmatprep.subr.mxu0 0.0
    %915 = vmatpush1.msra.mxu0 0.0
    %916 = vmatprep.subr.mxu0 0.0
    %917 = vmatpush1.msra.mxu0 0.0
    %918 = vmatprep.subr.mxu0 0.0
    %919 = vmatpush1.msra.mxu0 0.0
    %920 = vmatprep.subr.mxu0 0.0
    %921 = vmatpush1.msra.mxu0 0.0
    %922 = vmatprep.subr.mxu0 0.0
    %923 = vmatpush1.msra.mxu0 0.0
    %924 = vmatprep.subr.mxu0 0.0
    %925 = vmatpush1.msra.mxu0 0.0
    %926 = vmatprep.mubr.f32.mxu0 0.0
    %927 = vmatmul.mubr.f32.gmra.mrb[0].mxu0 %v845
    %v928 = vpop.f32.mrb[0].mxu0
    %v929 = vadd.f32 0.0, %v928
    %v930 = vpop.f32.mrb[0].mxu0
    %931 = vdwg.mxu0
    %v932 = vld [vmem:[%s1 + $0x30] sm:$0xff]
    %v933 = vld [vmem:[%s1 + $0x38] sm:$0xff]
    %v934 = vld [vmem:[%s1 + $0x40] sm:$0xff]
    %v935 = vld [vmem:[%s1 + $0x48] sm:$0xff]
    %937 = vset.pattern.permute.xlu0 0
    %938 = vperm.xlu0 %937, %v934
    %v939 = vpop.permute.xlu0 %938
    %942 = vset.pattern.permute.xlu0 0
    %943 = vperm.xlu0 %942, %v935
    %v944 = vpop.permute.xlu0 %943
    %v947 = vsel %vm46, %v932, 0
    %v950 = vsel %vm46, %v933, 0
    %952 = vmatprep.subr.mxu0 0.0
    %953 = vmatpush1.msra.mxu0 %v929
    %954 = vmatprep.subr.mxu0 0.0
    %955 = vmatpush1.msra.mxu0 0.0
    %956 = vmatprep.subr.mxu0 0.0
    %957 = vmatpush1.msra.mxu0 0.0
    %958 = vmatprep.subr.mxu0 0.0
    %959 = vmatpush1.msra.mxu0 0.0
    %960 = vmatprep.subr.mxu0 0.0
    %961 = vmatpush1.msra.mxu0 0.0
    %962 = vmatprep.subr.mxu0 0.0
    %963 = vmatpush1.msra.mxu0 0.0
    %964 = vmatprep.subr.mxu0 0.0
    %965 = vmatpush1.msra.mxu0 0.0
    %966 = vmatprep.subr.mxu0 0.0
    %967 = vmatpush1.msra.mxu0 0.0
    %968 = vmatprep.subr.mxu0 0.0
    %969 = vmatpush1.msra.mxu0 0.0
    %970 = vmatprep.subr.mxu0 0.0
    %971 = vmatpush1.msra.mxu0 0.0
    %972 = vmatprep.subr.mxu0 0.0
    %973 = vmatpush1.msra.mxu0 0.0
    %974 = vmatprep.subr.mxu0 0.0
    %975 = vmatpush1.msra.mxu0 0.0
    %976 = vmatprep.subr.mxu0 0.0
    %977 = vmatpush1.msra.mxu0 0.0
    %978 = vmatprep.subr.mxu0 0.0
    %979 = vmatpush1.msra.mxu0 0.0
    %980 = vmatprep.subr.mxu0 0.0
    %981 = vmatpush1.msra.mxu0 0.0
    %982 = vmatprep.subr.mxu0 0.0
    %983 = vmatpush1.msra.mxu0 0.0
    %984 = vmatprep.subr.mxu0 0.0
    %985 = vmatpush1.msra.mxu0 0.0
    %986 = vmatprep.subr.mxu0 0.0
    %987 = vmatpush1.msra.mxu0 0.0
    %988 = vmatprep.subr.mxu0 0.0
    %989 = vmatpush1.msra.mxu0 0.0
    %990 = vmatprep.subr.mxu0 0.0
    %991 = vmatpush1.msra.mxu0 0.0
    %992 = vmatprep.subr.mxu0 0.0
    %993 = vmatpush1.msra.mxu0 0.0
    %994 = vmatprep.subr.mxu0 0.0
    %995 = vmatpush1.msra.mxu0 0.0
    %996 = vmatprep.subr.mxu0 0.0
    %997 = vmatpush1.msra.mxu0 0.0
    %998 = vmatprep.subr.mxu0 0.0
    %999 = vmatpush1.msra.mxu0 0.0
    %1000 = vmatprep.subr.mxu0 0.0
    %1001 = vmatpush1.msra.mxu0 0.0
    %1002 = vmatprep.subr.mxu0 0.0
    %1003 = vmatpush1.msra.mxu0 0.0
    %1004 = vmatprep.subr.mxu0 0.0
    %1005 = vmatpush1.msra.mxu0 0.0
    %1006 = vmatprep.subr.mxu0 0.0
    %1007 = vmatpush1.msra.mxu0 0.0
    %1008 = vmatprep.subr.mxu0 0.0
    %1009 = vmatpush1.msra.mxu0 0.0
    %1010 = vmatprep.subr.mxu0 0.0
    %1011 = vmatpush1.msra.mxu0 0.0
    %1012 = vmatprep.subr.mxu0 0.0
    %1013 = vmatpush1.msra.mxu0 0.0
    %1014 = vmatprep.subr.mxu0 0.0
    %1015 = vmatpush1.msra.mxu0 0.0
    %1016 = vmatprep.mubr.f32.mxu0 0.0
    %1017 = vmatmul.mubr.f32.gmra.mrb[0].mxu0 %v947
    %v1018 = vpop.f32.mrb[0].mxu0
    %v1019 = vadd.f32 %v939, %v1018
    %v1020 = vpop.f32.mrb[0].mxu0
    %1021 = vmatprep.mubr.f32.mxu0 0.0
    %1022 = vmatmul.mubr.f32.gmra.mrb[0].mxu0 %v950
    %v1023 = vpop.f32.mrb[0].mxu0
    %v1024 = vadd.f32 %v944, %v1023
    %v1025 = vpop.f32.mrb[0].mxu0
    %1026 = vdwg.mxu0
    %vm1027 = vcmp.gt.f32.partialorder %v1019, 0.0
    %vm1028 = vcmp.gt.f32.partialorder %v1024, 0.0
    %v1029 = vmin.f32 %v1019, 0.0
    %v1030 = vmin.f32 %v1024, 0.0
    %v1031 = vmul.f32 %v1029, 1.442695
    %v1032 = vpow.pop %v1031
    %v1033 = vmul.f32 %v1030, 1.442695
    %v1034 = vpow.pop %v1033
    %v1035 = vsub.f32 %v1032, 1.0
    %v1036 = vsub.f32 %v1034, 1.0
    %v1037 = vsel %vm1027, %v1019, %v1035
    %v1038 = vsel %vm1028, %v1024, %v1036
    %v1039 = vld [vmem:[#allocation2 + $0x380] sm:$0xff]
    %v1040 = vld [vmem:[#allocation2 + $0x388] sm:$0xff]
    %v1041 = vld [vmem:[#allocation2 + $0x390] sm:$0xff]
    %v1042 = vld [vmem:[#allocation2 + $0x398] sm:$0xff]
    %v1043 = vld [vmem:[#allocation2 + $0x3a0] sm:$0xff]
    %v1044 = vld [vmem:[#allocation2 + $0x3a8] sm:$0xff]
    %v1045 = vld [vmem:[#allocation2 + $0x3b0] sm:$0xff]
    %v1046 = vld [vmem:[#allocation2 + $0x3b8] sm:$0xff]
    %v1047 = vld [vmem:[#allocation2 + $0x3c0] sm:$0xff]
    %v1048 = vld [vmem:[#allocation2 + $0x3c8] sm:$0xff]
    %v1049 = vld [vmem:[#allocation2 + $0x3d0] sm:$0xff]
    %v1050 = vld [vmem:[#allocation2 + $0x3d8] sm:$0xff]
    %v1051 = vld [vmem:[#allocation2 + $0x3e0] sm:$0xff]
    %v1052 = vld [vmem:[#allocation2 + $0x3e8] sm:$0xff]
    %v1053 = vld [vmem:[#allocation2 + $0x3f0] sm:$0xff]
    %v1054 = vld [vmem:[#allocation2 + $0x3f8] sm:$0xff]
    %v1055 = vld [vmem:[#allocation2 + $0x600] sm:$0xff]
    %v1056 = vld [vmem:[#allocation2 + $0x608] sm:$0xff]
    %1057 = vmatprep.subr.mxu0 0.0
    %1058 = vmatpush1.msra.mxu0 %v1039
    %1059 = vmatprep.subr.mxu0 0.0
    %1060 = vmatpush1.msra.mxu0 %v1040
    %1061 = vmatprep.subr.mxu0 0.0
    %1062 = vmatpush1.msra.mxu0 %v1041
    %1063 = vmatprep.subr.mxu0 0.0
    %1064 = vmatpush1.msra.mxu0 %v1042
    %1065 = vmatprep.subr.mxu0 0.0
    %1066 = vmatpush1.msra.mxu0 %v1043
    %1067 = vmatprep.subr.mxu0 0.0
    %1068 = vmatpush1.msra.mxu0 %v1044
    %1069 = vmatprep.subr.mxu0 0.0
    %1070 = vmatpush1.msra.mxu0 %v1045
    %1071 = vmatprep.subr.mxu0 0.0
    %1072 = vmatpush1.msra.mxu0 %v1046
    %1073 = vmatprep.subr.mxu0 0.0
    %1074 = vmatpush1.msra.mxu0 %v1047
    %1075 = vmatprep.subr.mxu0 0.0
    %1076 = vmatpush1.msra.mxu0 %v1048
    %1077 = vmatprep.subr.mxu0 0.0
    %1078 = vmatpush1.msra.mxu0 %v1049
    %1079 = vmatprep.subr.mxu0 0.0
    %1080 = vmatpush1.msra.mxu0 %v1050
    %1081 = vmatprep.subr.mxu0 0.0
    %1082 = vmatpush1.msra.mxu0 %v1051
    %1083 = vmatprep.subr.mxu0 0.0
    %1084 = vmatpush1.msra.mxu0 %v1052
    %1085 = vmatprep.subr.mxu0 0.0
    %1086 = vmatpush1.msra.mxu0 %v1053
    %1087 = vmatprep.subr.mxu0 0.0
    %1088 = vmatpush1.msra.mxu0 %v1054
    %1089 = vmatprep.subr.mxu0 0.0
    %1090 = vmatpush1.msra.mxu0 0.0
    %1091 = vmatprep.subr.mxu0 0.0
    %1092 = vmatpush1.msra.mxu0 0.0
    %1093 = vmatprep.subr.mxu0 0.0
    %1094 = vmatpush1.msra.mxu0 0.0
    %1095 = vmatprep.subr.mxu0 0.0
    %1096 = vmatpush1.msra.mxu0 0.0
    %1097 = vmatprep.subr.mxu0 0.0
    %1098 = vmatpush1.msra.mxu0 0.0
    %1099 = vmatprep.subr.mxu0 0.0
    %1100 = vmatpush1.msra.mxu0 0.0
    %1101 = vmatprep.subr.mxu0 0.0
    %1102 = vmatpush1.msra.mxu0 0.0
    %1103 = vmatprep.subr.mxu0 0.0
    %1104 = vmatpush1.msra.mxu0 0.0
    %1105 = vmatprep.subr.mxu0 0.0
    %1106 = vmatpush1.msra.mxu0 0.0
    %1107 = vmatprep.subr.mxu0 0.0
    %1108 = vmatpush1.msra.mxu0 0.0
    %1109 = vmatprep.subr.mxu0 0.0
    %1110 = vmatpush1.msra.mxu0 0.0
    %1111 = vmatprep.subr.mxu0 0.0
    %1112 = vmatpush1.msra.mxu0 0.0
    %1113 = vmatprep.subr.mxu0 0.0
    %1114 = vmatpush1.msra.mxu0 0.0
    %1115 = vmatprep.subr.mxu0 0.0
    %1116 = vmatpush1.msra.mxu0 0.0
    %1117 = vmatprep.subr.mxu0 0.0
    %1118 = vmatpush1.msra.mxu0 0.0
    %1119 = vmatprep.subr.mxu0 0.0
    %1120 = vmatpush1.msra.mxu0 0.0
    %1121 = vmatprep.mubr.f32.mxu0 0.0
    %1122 = vmatmul.mubr.f32.gmra.mrb[0].mxu0 %v1037
    %v1123 = vpop.f32.mrb[0].mxu0
    %v1124 = vadd.f32 0.0, %v1123
    %v1125 = vpop.f32.mrb[0].mxu0
    %1126 = vmatprep.mubr.f32.mxu0 0.0
    %1127 = vmatmul.mubr.f32.gmra.mrb[0].mxu0 %v1038
    %v1128 = vpop.f32.mrb[0].mxu0
    %v1129 = vadd.f32 0.0, %v1128
    %v1130 = vpop.f32.mrb[0].mxu0
    %1131 = vdwg.mxu0
    %v1132 = vmul.f32 %v1055, %v1124
    %v1133 = vmul.f32 %v1056, %v1129
    %v1134 = vld [vmem:[#allocation2 + $0x400] sm:$0xff]
    %v1135 = vld [vmem:[#allocation2 + $0x408] sm:$0xff]
    %v1136 = vld [vmem:[#allocation2 + $0x410] sm:$0xff]
    %v1137 = vld [vmem:[#allocation2 + $0x418] sm:$0xff]
    %v1138 = vld [vmem:[#allocation2 + $0x420] sm:$0xff]
    %v1139 = vld [vmem:[#allocation2 + $0x428] sm:$0xff]
    %v1140 = vld [vmem:[#allocation2 + $0x430] sm:$0xff]
    %v1141 = vld [vmem:[#allocation2 + $0x438] sm:$0xff]
    %v1142 = vld [vmem:[#allocation2 + $0x440] sm:$0xff]
    %v1143 = vld [vmem:[#allocation2 + $0x448] sm:$0xff]
    %v1144 = vld [vmem:[#allocation2 + $0x450] sm:$0xff]
    %v1145 = vld [vmem:[#allocation2 + $0x458] sm:$0xff]
    %v1146 = vld [vmem:[#allocation2 + $0x460] sm:$0xff]
    %v1147 = vld [vmem:[#allocation2 + $0x468] sm:$0xff]
    %v1148 = vld [vmem:[#allocation2 + $0x470] sm:$0xff]
    %v1149 = vld [vmem:[#allocation2 + $0x478] sm:$0xff]
    %v1150 = vld [vmem:[#allocation2 + $0x610] sm:$0xff]
    %v1151 = vld [vmem:[#allocation2 + $0x618] sm:$0xff]
    %1152 = vmatprep.subr.mxu0 0.0
    %1153 = vmatpush1.msra.mxu0 %v1134
    %1154 = vmatprep.subr.mxu0 0.0
    %1155 = vmatpush1.msra.mxu0 %v1135
    %1156 = vmatprep.subr.mxu0 0.0
    %1157 = vmatpush1.msra.mxu0 %v1136
    %1158 = vmatprep.subr.mxu0 0.0
    %1159 = vmatpush1.msra.mxu0 %v1137
    %1160 = vmatprep.subr.mxu0 0.0
    %1161 = vmatpush1.msra.mxu0 %v1138
    %1162 = vmatprep.subr.mxu0 0.0
    %1163 = vmatpush1.msra.mxu0 %v1139
    %1164 = vmatprep.subr.mxu0 0.0
    %1165 = vmatpush1.msra.mxu0 %v1140
    %1166 = vmatprep.subr.mxu0 0.0
    %1167 = vmatpush1.msra.mxu0 %v1141
    %1168 = vmatprep.subr.mxu0 0.0
    %1169 = vmatpush1.msra.mxu0 %v1142
    %1170 = vmatprep.subr.mxu0 0.0
    %1171 = vmatpush1.msra.mxu0 %v1143
    %1172 = vmatprep.subr.mxu0 0.0
    %1173 = vmatpush1.msra.mxu0 %v1144
    %1174 = vmatprep.subr.mxu0 0.0
    %1175 = vmatpush1.msra.mxu0 %v1145
    %1176 = vmatprep.subr.mxu0 0.0
    %1177 = vmatpush1.msra.mxu0 %v1146
    %1178 = vmatprep.subr.mxu0 0.0
    %1179 = vmatpush1.msra.mxu0 %v1147
    %1180 = vmatprep.subr.mxu0 0.0
    %1181 = vmatpush1.msra.mxu0 %v1148
    %1182 = vmatprep.subr.mxu0 0.0
    %1183 = vmatpush1.msra.mxu0 %v1149
    %1184 = vmatprep.subr.mxu0 0.0
    %1185 = vmatpush1.msra.mxu0 0.0
    %1186 = vmatprep.subr.mxu0 0.0
    %1187 = vmatpush1.msra.mxu0 0.0
    %1188 = vmatprep.subr.mxu0 0.0
    %1189 = vmatpush1.msra.mxu0 0.0
    %1190 = vmatprep.subr.mxu0 0.0
    %1191 = vmatpush1.msra.mxu0 0.0
    %1192 = vmatprep.subr.mxu0 0.0
    %1193 = vmatpush1.msra.mxu0 0.0
    %1194 = vmatprep.subr.mxu0 0.0
    %1195 = vmatpush1.msra.mxu0 0.0
    %1196 = vmatprep.subr.mxu0 0.0
    %1197 = vmatpush1.msra.mxu0 0.0
    %1198 = vmatprep.subr.mxu0 0.0
    %1199 = vmatpush1.msra.mxu0 0.0
    %1200 = vmatprep.subr.mxu0 0.0
    %1201 = vmatpush1.msra.mxu0 0.0
    %1202 = vmatprep.subr.mxu0 0.0
    %1203 = vmatpush1.msra.mxu0 0.0
    %1204 = vmatprep.subr.mxu0 0.0
    %1205 = vmatpush1.msra.mxu0 0.0
    %1206 = vmatprep.subr.mxu0 0.0
    %1207 = vmatpush1.msra.mxu0 0.0
    %1208 = vmatprep.subr.mxu0 0.0
    %1209 = vmatpush1.msra.mxu0 0.0
    %1210 = vmatprep.subr.mxu0 0.0
    %1211 = vmatpush1.msra.mxu0 0.0
    %1212 = vmatprep.subr.mxu0 0.0
    %1213 = vmatpush1.msra.mxu0 0.0
    %1214 = vmatprep.subr.mxu0 0.0
    %1215 = vmatpush1.msra.mxu0 0.0
    %1216 = vmatprep.mubr.f32.mxu0 0.0
    %1217 = vmatmul.mubr.f32.gmra.mrb[0].mxu0 %v1037
    %v1218 = vpop.f32.mrb[0].mxu0
    %v1219 = vadd.f32 0.0, %v1218
    %v1220 = vpop.f32.mrb[0].mxu0
    %1221 = vmatprep.mubr.f32.mxu0 0.0
    %1222 = vmatmul.mubr.f32.gmra.mrb[0].mxu0 %v1038
    %v1223 = vpop.f32.mrb[0].mxu0
    %v1224 = vadd.f32 0.0, %v1223
    %v1225 = vpop.f32.mrb[0].mxu0
    %1226 = vdwg.mxu0
    %v1227 = vmul.f32 %v1150, %v1219
    %v1228 = vmul.f32 %v1151, %v1224
    %v1229 = vadd.f32 %v1132, %v1227
    %v1230 = vadd.f32 %v1133, %v1228
    %v1231 = vld [vmem:[#allocation2 + $0x480] sm:$0xff]
    %v1232 = vld [vmem:[#allocation2 + $0x488] sm:$0xff]
    %v1233 = vld [vmem:[#allocation2 + $0x490] sm:$0xff]
    %v1234 = vld [vmem:[#allocation2 + $0x498] sm:$0xff]
    %v1235 = vld [vmem:[#allocation2 + $0x4a0] sm:$0xff]
    %v1236 = vld [vmem:[#allocation2 + $0x4a8] sm:$0xff]
    %v1237 = vld [vmem:[#allocation2 + $0x4b0] sm:$0xff]
    %v1238 = vld [vmem:[#allocation2 + $0x4b8] sm:$0xff]
    %v1239 = vld [vmem:[#allocation2 + $0x4c0] sm:$0xff]
    %v1240 = vld [vmem:[#allocation2 + $0x4c8] sm:$0xff]
    %v1241 = vld [vmem:[#allocation2 + $0x4d0] sm:$0xff]
    %v1242 = vld [vmem:[#allocation2 + $0x4d8] sm:$0xff]
    %v1243 = vld [vmem:[#allocation2 + $0x4e0] sm:$0xff]
    %v1244 = vld [vmem:[#allocation2 + $0x4e8] sm:$0xff]
    %v1245 = vld [vmem:[#allocation2 + $0x4f0] sm:$0xff]
    %v1246 = vld [vmem:[#allocation2 + $0x4f8] sm:$0xff]
    %v1247 = vld [vmem:[#allocation2 + $0x620] sm:$0xff]
    %v1248 = vld [vmem:[#allocation2 + $0x628] sm:$0xff]
    %1249 = vmatprep.subr.mxu0 0.0
    %1250 = vmatpush1.msra.mxu0 %v1231
    %1251 = vmatprep.subr.mxu0 0.0
    %1252 = vmatpush1.msra.mxu0 %v1232
    %1253 = vmatprep.subr.mxu0 0.0
    %1254 = vmatpush1.msra.mxu0 %v1233
    %1255 = vmatprep.subr.mxu0 0.0
    %1256 = vmatpush1.msra.mxu0 %v1234
    %1257 = vmatprep.subr.mxu0 0.0
    %1258 = vmatpush1.msra.mxu0 %v1235
    %1259 = vmatprep.subr.mxu0 0.0
    %1260 = vmatpush1.msra.mxu0 %v1236
    %1261 = vmatprep.subr.mxu0 0.0
    %1262 = vmatpush1.msra.mxu0 %v1237
    %1263 = vmatprep.subr.mxu0 0.0
    %1264 = vmatpush1.msra.mxu0 %v1238
    %1265 = vmatprep.subr.mxu0 0.0
    %1266 = vmatpush1.msra.mxu0 %v1239
    %1267 = vmatprep.subr.mxu0 0.0
    %1268 = vmatpush1.msra.mxu0 %v1240
    %1269 = vmatprep.subr.mxu0 0.0
    %1270 = vmatpush1.msra.mxu0 %v1241
    %1271 = vmatprep.subr.mxu0 0.0
    %1272 = vmatpush1.msra.mxu0 %v1242
    %1273 = vmatprep.subr.mxu0 0.0
    %1274 = vmatpush1.msra.mxu0 %v1243
    %1275 = vmatprep.subr.mxu0 0.0
    %1276 = vmatpush1.msra.mxu0 %v1244
    %1277 = vmatprep.subr.mxu0 0.0
    %1278 = vmatpush1.msra.mxu0 %v1245
    %1279 = vmatprep.subr.mxu0 0.0
    %1280 = vmatpush1.msra.mxu0 %v1246
    %1281 = vmatprep.subr.mxu0 0.0
    %1282 = vmatpush1.msra.mxu0 0.0
    %1283 = vmatprep.subr.mxu0 0.0
    %1284 = vmatpush1.msra.mxu0 0.0
    %1285 = vmatprep.subr.mxu0 0.0
    %1286 = vmatpush1.msra.mxu0 0.0
    %1287 = vmatprep.subr.mxu0 0.0
    %1288 = vmatpush1.msra.mxu0 0.0
    %1289 = vmatprep.subr.mxu0 0.0
    %1290 = vmatpush1.msra.mxu0 0.0
    %1291 = vmatprep.subr.mxu0 0.0
    %1292 = vmatpush1.msra.mxu0 0.0
    %1293 = vmatprep.subr.mxu0 0.0
    %1294 = vmatpush1.msra.mxu0 0.0
    %1295 = vmatprep.subr.mxu0 0.0
    %1296 = vmatpush1.msra.mxu0 0.0
    %1297 = vmatprep.subr.mxu0 0.0
    %1298 = vmatpush1.msra.mxu0 0.0
    %1299 = vmatprep.subr.mxu0 0.0
    %1300 = vmatpush1.msra.mxu0 0.0
    %1301 = vmatprep.subr.mxu0 0.0
    %1302 = vmatpush1.msra.mxu0 0.0
    %1303 = vmatprep.subr.mxu0 0.0
    %1304 = vmatpush1.msra.mxu0 0.0
    %1305 = vmatprep.subr.mxu0 0.0
    %1306 = vmatpush1.msra.mxu0 0.0
    %1307 = vmatprep.subr.mxu0 0.0
    %1308 = vmatpush1.msra.mxu0 0.0
    %1309 = vmatprep.subr.mxu0 0.0
    %1310 = vmatpush1.msra.mxu0 0.0
    %1311 = vmatprep.subr.mxu0 0.0
    %1312 = vmatpush1.msra.mxu0 0.0
    %1313 = vmatprep.mubr.f32.mxu0 0.0
    %1314 = vmatmul.mubr.f32.gmra.mrb[0].mxu0 %v1037
    %v1315 = vpop.f32.mrb[0].mxu0
    %v1316 = vadd.f32 0.0, %v1315
    %v1317 = vpop.f32.mrb[0].mxu0
    %1318 = vmatprep.mubr.f32.mxu0 0.0
    %1319 = vmatmul.mubr.f32.gmra.mrb[0].mxu0 %v1038
    %v1320 = vpop.f32.mrb[0].mxu0
    %v1321 = vadd.f32 0.0, %v1320
    %v1322 = vpop.f32.mrb[0].mxu0
    %1323 = vdwg.mxu0
    %v1324 = vmul.f32 %v1247, %v1316
    %v1325 = vmul.f32 %v1248, %v1321
    %v1326 = vadd.f32 %v1229, %v1324
    %v1327 = vadd.f32 %v1230, %v1325
    %v1328 = vld [vmem:[#allocation2 + $0x500] sm:$0xff]
    %v1329 = vld [vmem:[#allocation2 + $0x508] sm:$0xff]
    %v1330 = vld [vmem:[#allocation2 + $0x510] sm:$0xff]
    %v1331 = vld [vmem:[#allocation2 + $0x518] sm:$0xff]
    %v1332 = vld [vmem:[#allocation2 + $0x520] sm:$0xff]
    %v1333 = vld [vmem:[#allocation2 + $0x528] sm:$0xff]
    %v1334 = vld [vmem:[#allocation2 + $0x530] sm:$0xff]
    %v1335 = vld [vmem:[#allocation2 + $0x538] sm:$0xff]
    %v1336 = vld [vmem:[#allocation2 + $0x540] sm:$0xff]
    %v1337 = vld [vmem:[#allocation2 + $0x548] sm:$0xff]
    %v1338 = vld [vmem:[#allocation2 + $0x550] sm:$0xff]
    %v1339 = vld [vmem:[#allocation2 + $0x558] sm:$0xff]
    %v1340 = vld [vmem:[#allocation2 + $0x560] sm:$0xff]
    %v1341 = vld [vmem:[#allocation2 + $0x568] sm:$0xff]
    %v1342 = vld [vmem:[#allocation2 + $0x570] sm:$0xff]
    %v1343 = vld [vmem:[#allocation2 + $0x578] sm:$0xff]
    %v1344 = vld [vmem:[#allocation2 + $0x630] sm:$0xff]
    %v1345 = vld [vmem:[#allocation2 + $0x638] sm:$0xff]
    %1346 = vmatprep.subr.mxu0 0.0
    %1347 = vmatpush1.msra.mxu0 %v1328
    %1348 = vmatprep.subr.mxu0 0.0
    %1349 = vmatpush1.msra.mxu0 %v1329
    %1350 = vmatprep.subr.mxu0 0.0
    %1351 = vmatpush1.msra.mxu0 %v1330
    %1352 = vmatprep.subr.mxu0 0.0
    %1353 = vmatpush1.msra.mxu0 %v1331
    %1354 = vmatprep.subr.mxu0 0.0
    %1355 = vmatpush1.msra.mxu0 %v1332
    %1356 = vmatprep.subr.mxu0 0.0
    %1357 = vmatpush1.msra.mxu0 %v1333
    %1358 = vmatprep.subr.mxu0 0.0
    %1359 = vmatpush1.msra.mxu0 %v1334
    %1360 = vmatprep.subr.mxu0 0.0
    %1361 = vmatpush1.msra.mxu0 %v1335
    %1362 = vmatprep.subr.mxu0 0.0
    %1363 = vmatpush1.msra.mxu0 %v1336
    %1364 = vmatprep.subr.mxu0 0.0
    %1365 = vmatpush1.msra.mxu0 %v1337
    %1366 = vmatprep.subr.mxu0 0.0
    %1367 = vmatpush1.msra.mxu0 %v1338
    %1368 = vmatprep.subr.mxu0 0.0
    %1369 = vmatpush1.msra.mxu0 %v1339
    %1370 = vmatprep.subr.mxu0 0.0
    %1371 = vmatpush1.msra.mxu0 %v1340
    %1372 = vmatprep.subr.mxu0 0.0
    %1373 = vmatpush1.msra.mxu0 %v1341
    %1374 = vmatprep.subr.mxu0 0.0
    %1375 = vmatpush1.msra.mxu0 %v1342
    %1376 = vmatprep.subr.mxu0 0.0
    %1377 = vmatpush1.msra.mxu0 %v1343
    %1378 = vmatprep.subr.mxu0 0.0
    %1379 = vmatpush1.msra.mxu0 0.0
    %1380 = vmatprep.subr.mxu0 0.0
    %1381 = vmatpush1.msra.mxu0 0.0
    %1382 = vmatprep.subr.mxu0 0.0
    %1383 = vmatpush1.msra.mxu0 0.0
    %1384 = vmatprep.subr.mxu0 0.0
    %1385 = vmatpush1.msra.mxu0 0.0
    %1386 = vmatprep.subr.mxu0 0.0
    %1387 = vmatpush1.msra.mxu0 0.0
    %1388 = vmatprep.subr.mxu0 0.0
    %1389 = vmatpush1.msra.mxu0 0.0
    %1390 = vmatprep.subr.mxu0 0.0
    %1391 = vmatpush1.msra.mxu0 0.0
    %1392 = vmatprep.subr.mxu0 0.0
    %1393 = vmatpush1.msra.mxu0 0.0
    %1394 = vmatprep.subr.mxu0 0.0
    %1395 = vmatpush1.msra.mxu0 0.0
    %1396 = vmatprep.subr.mxu0 0.0
    %1397 = vmatpush1.msra.mxu0 0.0
    %1398 = vmatprep.subr.mxu0 0.0
    %1399 = vmatpush1.msra.mxu0 0.0
    %1400 = vmatprep.subr.mxu0 0.0
    %1401 = vmatpush1.msra.mxu0 0.0
    %1402 = vmatprep.subr.mxu0 0.0
    %1403 = vmatpush1.msra.mxu0 0.0
    %1404 = vmatprep.subr.mxu0 0.0
    %1405 = vmatpush1.msra.mxu0 0.0
    %1406 = vmatprep.subr.mxu0 0.0
    %1407 = vmatpush1.msra.mxu0 0.0
    %1408 = vmatprep.subr.mxu0 0.0
    %1409 = vmatpush1.msra.mxu0 0.0
    %1410 = vmatprep.mubr.f32.mxu0 0.0
    %1411 = vmatmul.mubr.f32.gmra.mrb[0].mxu0 %v1037
    %v1412 = vpop.f32.mrb[0].mxu0
    %v1413 = vadd.f32 0.0, %v1412
    %v1414 = vpop.f32.mrb[0].mxu0
    %1415 = vmatprep.mubr.f32.mxu0 0.0
    %1416 = vmatmul.mubr.f32.gmra.mrb[0].mxu0 %v1038
    %v1417 = vpop.f32.mrb[0].mxu0
    %v1418 = vadd.f32 0.0, %v1417
    %v1419 = vpop.f32.mrb[0].mxu0
    %1420 = vdwg.mxu0
    %v1421 = vmul.f32 %v1344, %v1413
    %v1422 = vmul.f32 %v1345, %v1418
    %v1423 = vadd.f32 %v1326, %v1421
    %v1424 = vadd.f32 %v1327, %v1422
    %v1425 = vld [vmem:[#allocation2 + $0x580] sm:$0xff]
    %v1426 = vld [vmem:[#allocation2 + $0x588] sm:$0xff]
    %v1427 = vld [vmem:[#allocation2 + $0x590] sm:$0xff]
    %v1428 = vld [vmem:[#allocation2 + $0x598] sm:$0xff]
    %v1429 = vld [vmem:[#allocation2 + $0x5a0] sm:$0xff]
    %v1430 = vld [vmem:[#allocation2 + $0x5a8] sm:$0xff]
    %v1431 = vld [vmem:[#allocation2 + $0x5b0] sm:$0xff]
    %v1432 = vld [vmem:[#allocation2 + $0x5b8] sm:$0xff]
    %v1433 = vld [vmem:[#allocation2 + $0x5c0] sm:$0xff]
    %v1434 = vld [vmem:[#allocation2 + $0x5c8] sm:$0xff]
    %v1435 = vld [vmem:[#allocation2 + $0x5d0] sm:$0xff]
    %v1436 = vld [vmem:[#allocation2 + $0x5d8] sm:$0xff]
    %v1437 = vld [vmem:[#allocation2 + $0x5e0] sm:$0xff]
    %v1438 = vld [vmem:[#allocation2 + $0x5e8] sm:$0xff]
    %v1439 = vld [vmem:[#allocation2 + $0x5f0] sm:$0xff]
    %v1440 = vld [vmem:[#allocation2 + $0x5f8] sm:$0xff]
    %v1441 = vld [vmem:[#allocation2 + $0x640] sm:$0xff]
    %v1442 = vld [vmem:[#allocation2 + $0x648] sm:$0xff]
    %1443 = vmatprep.subr.mxu0 0.0
    %1444 = vmatpush1.msra.mxu0 %v1425
    %1445 = vmatprep.subr.mxu0 0.0
    %1446 = vmatpush1.msra.mxu0 %v1426
    %1447 = vmatprep.subr.mxu0 0.0
    %1448 = vmatpush1.msra.mxu0 %v1427
    %1449 = vmatprep.subr.mxu0 0.0
    %1450 = vmatpush1.msra.mxu0 %v1428
    %1451 = vmatprep.subr.mxu0 0.0
    %1452 = vmatpush1.msra.mxu0 %v1429
    %1453 = vmatprep.subr.mxu0 0.0
    %1454 = vmatpush1.msra.mxu0 %v1430
    %1455 = vmatprep.subr.mxu0 0.0
    %1456 = vmatpush1.msra.mxu0 %v1431
    %1457 = vmatprep.subr.mxu0 0.0
    %1458 = vmatpush1.msra.mxu0 %v1432
    %1459 = vmatprep.subr.mxu0 0.0
    %1460 = vmatpush1.msra.mxu0 %v1433
    %1461 = vmatprep.subr.mxu0 0.0
    %1462 = vmatpush1.msra.mxu0 %v1434
    %1463 = vmatprep.subr.mxu0 0.0
    %1464 = vmatpush1.msra.mxu0 %v1435
    %1465 = vmatprep.subr.mxu0 0.0
    %1466 = vmatpush1.msra.mxu0 %v1436
    %1467 = vmatprep.subr.mxu0 0.0
    %1468 = vmatpush1.msra.mxu0 %v1437
    %1469 = vmatprep.subr.mxu0 0.0
    %1470 = vmatpush1.msra.mxu0 %v1438
    %1471 = vmatprep.subr.mxu0 0.0
    %1472 = vmatpush1.msra.mxu0 %v1439
    %1473 = vmatprep.subr.mxu0 0.0
    %1474 = vmatpush1.msra.mxu0 %v1440
    %1475 = vmatprep.subr.mxu0 0.0
    %1476 = vmatpush1.msra.mxu0 0.0
    %1477 = vmatprep.subr.mxu0 0.0
    %1478 = vmatpush1.msra.mxu0 0.0
    %1479 = vmatprep.subr.mxu0 0.0
    %1480 = vmatpush1.msra.mxu0 0.0
    %1481 = vmatprep.subr.mxu0 0.0
    %1482 = vmatpush1.msra.mxu0 0.0
    %1483 = vmatprep.subr.mxu0 0.0
    %1484 = vmatpush1.msra.mxu0 0.0
    %1485 = vmatprep.subr.mxu0 0.0
    %1486 = vmatpush1.msra.mxu0 0.0
    %1487 = vmatprep.subr.mxu0 0.0
    %1488 = vmatpush1.msra.mxu0 0.0
    %1489 = vmatprep.subr.mxu0 0.0
    %1490 = vmatpush1.msra.mxu0 0.0
    %1491 = vmatprep.subr.mxu0 0.0
    %1492 = vmatpush1.msra.mxu0 0.0
    %1493 = vmatprep.subr.mxu0 0.0
    %1494 = vmatpush1.msra.mxu0 0.0
    %1495 = vmatprep.subr.mxu0 0.0
    %1496 = vmatpush1.msra.mxu0 0.0
    %1497 = vmatprep.subr.mxu0 0.0
    %1498 = vmatpush1.msra.mxu0 0.0
    %1499 = vmatprep.subr.mxu0 0.0
    %1500 = vmatpush1.msra.mxu0 0.0
    %1501 = vmatprep.subr.mxu0 0.0
    %1502 = vmatpush1.msra.mxu0 0.0
    %1503 = vmatprep.subr.mxu0 0.0
    %1504 = vmatpush1.msra.mxu0 0.0
    %1505 = vmatprep.subr.mxu0 0.0
    %1506 = vmatpush1.msra.mxu0 0.0
    %1507 = vmatprep.mubr.f32.mxu0 0.0
    %1508 = vmatmul.mubr.f32.gmra.mrb[0].mxu0 %v1037
    %v1509 = vpop.f32.mrb[0].mxu0
    %v1510 = vadd.f32 0.0, %v1509
    %v1511 = vpop.f32.mrb[0].mxu0
    %1512 = vmatprep.mubr.f32.mxu0 0.0
    %1513 = vmatmul.mubr.f32.gmra.mrb[0].mxu0 %v1038
    %v1514 = vpop.f32.mrb[0].mxu0
    %v1515 = vadd.f32 0.0, %v1514
    %v1516 = vpop.f32.mrb[0].mxu0
    %1517 = vdwg.mxu0
    %v1518 = vmul.f32 %v1441, %v1510
    %v1519 = vmul.f32 %v1442, %v1515
    %v1520 = vadd.f32 %v1423, %v1518
    %v1521 = vadd.f32 %v1424, %v1519
    %v1522 = vld [vmem:[%s1 + $0x50] sm:$0xff]
    %v1523 = vld [vmem:[%s1 + $0x58] sm:$0xff]
    %v1524 = vld [vmem:[%s1 + $0x60] sm:$0xff]
    %v1525 = vld [vmem:[%s1 + $0x68] sm:$0xff]
    %1527 = vset.pattern.permute.xlu0 0
    %1528 = vperm.xlu0 %1527, %v1524
    %v1529 = vpop.permute.xlu0 %1528
    %1532 = vset.pattern.permute.xlu0 0
    %1533 = vperm.xlu0 %1532, %v1525
    %v1534 = vpop.permute.xlu0 %1533
    %vm1536 = vcmask 130048
    %v1538 = vsel %vm1536, %v1522, 0
    %v1541 = vsel %vm1536, %v1523, 0
    %1543 = vmatprep.subr.mxu0 0.0
    %1544 = vmatpush1.msra.mxu0 %v1520
    %1545 = vmatprep.subr.mxu0 0.0
    %1546 = vmatpush1.msra.mxu0 %v1521
    %1547 = vmatprep.subr.mxu0 0.0
    %1548 = vmatpush1.msra.mxu0 0.0
    %1549 = vmatprep.subr.mxu0 0.0
    %1550 = vmatpush1.msra.mxu0 0.0
    %1551 = vmatprep.subr.mxu0 0.0
    %1552 = vmatpush1.msra.mxu0 0.0
    %1553 = vmatprep.subr.mxu0 0.0
    %1554 = vmatpush1.msra.mxu0 0.0
    %1555 = vmatprep.subr.mxu0 0.0
    %1556 = vmatpush1.msra.mxu0 0.0
    %1557 = vmatprep.subr.mxu0 0.0
    %1558 = vmatpush1.msra.mxu0 0.0
    %1559 = vmatprep.subr.mxu0 0.0
    %1560 = vmatpush1.msra.mxu0 0.0
    %1561 = vmatprep.subr.mxu0 0.0
    %1562 = vmatpush1.msra.mxu0 0.0
    %1563 = vmatprep.subr.mxu0 0.0
    %1564 = vmatpush1.msra.mxu0 0.0
    %1565 = vmatprep.subr.mxu0 0.0
    %1566 = vmatpush1.msra.mxu0 0.0
    %1567 = vmatprep.subr.mxu0 0.0
    %1568 = vmatpush1.msra.mxu0 0.0
    %1569 = vmatprep.subr.mxu0 0.0
    %1570 = vmatpush1.msra.mxu0 0.0
    %1571 = vmatprep.subr.mxu0 0.0
    %1572 = vmatpush1.msra.mxu0 0.0
    %1573 = vmatprep.subr.mxu0 0.0
    %1574 = vmatpush1.msra.mxu0 0.0
    %1575 = vmatprep.subr.mxu0 0.0
    %1576 = vmatpush1.msra.mxu0 0.0
    %1577 = vmatprep.subr.mxu0 0.0
    %1578 = vmatpush1.msra.mxu0 0.0
    %1579 = vmatprep.subr.mxu0 0.0
    %1580 = vmatpush1.msra.mxu0 0.0
    %1581 = vmatprep.subr.mxu0 0.0
    %1582 = vmatpush1.msra.mxu0 0.0
    %1583 = vmatprep.subr.mxu0 0.0
    %1584 = vmatpush1.msra.mxu0 0.0
    %1585 = vmatprep.subr.mxu0 0.0
    %1586 = vmatpush1.msra.mxu0 0.0
    %1587 = vmatprep.subr.mxu0 0.0
    %1588 = vmatpush1.msra.mxu0 0.0
    %1589 = vmatprep.subr.mxu0 0.0
    %1590 = vmatpush1.msra.mxu0 0.0
    %1591 = vmatprep.subr.mxu0 0.0
    %1592 = vmatpush1.msra.mxu0 0.0
    %1593 = vmatprep.subr.mxu0 0.0
    %1594 = vmatpush1.msra.mxu0 0.0
    %1595 = vmatprep.subr.mxu0 0.0
    %1596 = vmatpush1.msra.mxu0 0.0
    %1597 = vmatprep.subr.mxu0 0.0
    %1598 = vmatpush1.msra.mxu0 0.0
    %1599 = vmatprep.subr.mxu0 0.0
    %1600 = vmatpush1.msra.mxu0 0.0
    %1601 = vmatprep.subr.mxu0 0.0
    %1602 = vmatpush1.msra.mxu0 0.0
    %1603 = vmatprep.subr.mxu0 0.0
    %1604 = vmatpush1.msra.mxu0 0.0
    %1605 = vmatprep.subr.mxu0 0.0
    %1606 = vmatpush1.msra.mxu0 0.0
    %1607 = vmatprep.mubr.f32.mxu0 0.0
    %1608 = vmatmul.mubr.f32.gmra.mrb[0].mxu0 %v1538
    %v1609 = vpop.f32.mrb[0].mxu0
    %v1610 = vadd.f32 %v1529, %v1609
    %v1611 = vpop.f32.mrb[0].mxu0
    %1612 = vmatprep.mubr.f32.mxu0 0.0
    %1613 = vmatmul.mubr.f32.gmra.mrb[0].mxu0 %v1541
    %v1614 = vpop.f32.mrb[0].mxu0
    %v1615 = vadd.f32 %v1534, %v1614
    %v1616 = vpop.f32.mrb[0].mxu0
    %1617 = vdwg.mxu0
    %vm1618 = vcmp.gt.f32.partialorder %v1610, 0.0
    %vm1619 = vcmp.gt.f32.partialorder %v1615, 0.0
    %v1620 = vmin.f32 %v1610, 0.0
    %v1621 = vmin.f32 %v1615, 0.0
    %v1622 = vmul.f32 %v1620, 1.442695
    %v1623 = vpow.pop %v1622
    %v1624 = vmul.f32 %v1621, 1.442695
    %v1625 = vpow.pop %v1624
    %v1626 = vsub.f32 %v1623, 1.0
    %v1627 = vsub.f32 %v1625, 1.0
    %v1628 = vsel %vm1618, %v1610, %v1626
    %v1629 = vsel %vm1619, %v1615, %v1627
    %v1630 = vld [vmem:[%s1 + $0x70] sm:$0xff]
    %v1632 = vsel %vm1536, %v1630, 0
    %1634 = vmatprep.subr.mxu0 0.0
    %1635 = vmatpush1.msra.mxu0 %v1628
    %1636 = vmatprep.subr.mxu0 0.0
    %1637 = vmatpush1.msra.mxu0 %v1629
    %1638 = vmatprep.subr.mxu0 0.0
    %1639 = vmatpush1.msra.mxu0 0.0
    %1640 = vmatprep.subr.mxu0 0.0
    %1641 = vmatpush1.msra.mxu0 0.0
    %1642 = vmatprep.subr.mxu0 0.0
    %1643 = vmatpush1.msra.mxu0 0.0
    %1644 = vmatprep.subr.mxu0 0.0
    %1645 = vmatpush1.msra.mxu0 0.0
    %1646 = vmatprep.subr.mxu0 0.0
    %1647 = vmatpush1.msra.mxu0 0.0
    %1648 = vmatprep.subr.mxu0 0.0
    %1649 = vmatpush1.msra.mxu0 0.0
    %1650 = vmatprep.subr.mxu0 0.0
    %1651 = vmatpush1.msra.mxu0 0.0
    %1652 = vmatprep.subr.mxu0 0.0
    %1653 = vmatpush1.msra.mxu0 0.0
    %1654 = vmatprep.subr.mxu0 0.0
    %1655 = vmatpush1.msra.mxu0 0.0
    %1656 = vmatprep.subr.mxu0 0.0
    %1657 = vmatpush1.msra.mxu0 0.0
    %1658 = vmatprep.subr.mxu0 0.0
    %1659 = vmatpush1.msra.mxu0 0.0
    %1660 = vmatprep.subr.mxu0 0.0
    %1661 = vmatpush1.msra.mxu0 0.0
    %1662 = vmatprep.subr.mxu0 0.0
    %1663 = vmatpush1.msra.mxu0 0.0
    %1664 = vmatprep.subr.mxu0 0.0
    %1665 = vmatpush1.msra.mxu0 0.0
    %1666 = vmatprep.subr.mxu0 0.0
    %1667 = vmatpush1.msra.mxu0 0.0
    %1668 = vmatprep.subr.mxu0 0.0
    %1669 = vmatpush1.msra.mxu0 0.0
    %1670 = vmatprep.subr.mxu0 0.0
    %1671 = vmatpush1.msra.mxu0 0.0
    %1672 = vmatprep.subr.mxu0 0.0
    %1673 = vmatpush1.msra.mxu0 0.0
    %1674 = vmatprep.subr.mxu0 0.0
    %1675 = vmatpush1.msra.mxu0 0.0
    %1676 = vmatprep.subr.mxu0 0.0
    %1677 = vmatpush1.msra.mxu0 0.0
    %1678 = vmatprep.subr.mxu0 0.0
    %1679 = vmatpush1.msra.mxu0 0.0
    %1680 = vmatprep.subr.mxu0 0.0
    %1681 = vmatpush1.msra.mxu0 0.0
    %1682 = vmatprep.subr.mxu0 0.0
    %1683 = vmatpush1.msra.mxu0 0.0
    %1684 = vmatprep.subr.mxu0 0.0
    %1685 = vmatpush1.msra.mxu0 0.0
    %1686 = vmatprep.subr.mxu0 0.0
    %1687 = vmatpush1.msra.mxu0 0.0
    %1688 = vmatprep.subr.mxu0 0.0
    %1689 = vmatpush1.msra.mxu0 0.0
    %1690 = vmatprep.subr.mxu0 0.0
    %1691 = vmatpush1.msra.mxu0 0.0
    %1692 = vmatprep.subr.mxu0 0.0
    %1693 = vmatpush1.msra.mxu0 0.0
    %1694 = vmatprep.subr.mxu0 0.0
    %1695 = vmatpush1.msra.mxu0 0.0
    %1696 = vmatprep.subr.mxu0 0.0
    %1697 = vmatpush1.msra.mxu0 0.0
    %1698 = vmatprep.mubr.f32.mxu0 0.0
    %1699 = vmatmul.mubr.f32.gmra.mrb[0].mxu0 %v1632
    %v1700 = vpop.f32.mrb[0].mxu0
    %v1701 = vadd.f32 0.0, %v1700
    %v1702 = vpop.f32.mrb[0].mxu0
    %1703 = vdwg.mxu0
    %v1704 = vld [vmem:[#allocation2 + $0x80] sm:$0xff]
    %v1705 = vld [vmem:[#allocation2 + $0x88] sm:$0xff]
    %v1706 = vld [vmem:[#allocation2 + $0x90] sm:$0xff]
    %v1707 = vld [vmem:[#allocation2 + $0x98] sm:$0xff]
    %v1708 = vld [vmem:[#allocation2 + $0xa0] sm:$0xff]
    %v1709 = vld [vmem:[#allocation2 + $0xa8] sm:$0xff]
    %v1710 = vld [vmem:[#allocation2 + $0xb0] sm:$0xff]
    %v1711 = vld [vmem:[#allocation2 + $0xb8] sm:$0xff]
    %v1712 = vld [vmem:[#allocation2 + $0xc0] sm:$0xff]
    %v1713 = vld [vmem:[#allocation2 + $0xc8] sm:$0xff]
    %v1714 = vld [vmem:[#allocation2 + $0xd0] sm:$0xff]
    %v1715 = vld [vmem:[#allocation2 + $0xd8] sm:$0xff]
    %v1716 = vld [vmem:[#allocation2 + $0xe0] sm:$0xff]
    %v1717 = vld [vmem:[#allocation2 + $0xe8] sm:$0xff]
    %v1718 = vld [vmem:[#allocation2 + $0xf0] sm:$0xff]
    %v1719 = vld [vmem:[#allocation2 + $0xf8] sm:$0xff]
    %v1720 = vld [vmem:[%s1 + $0x78] sm:$0x1]
    %s1722 = vtos %v1720
    %v1723 = vstv %s1722
    %1725 = vmatprep.subr.mxu0 0.0
    %1726 = vmatpush1.msra.mxu0 %v1704
    %1727 = vmatprep.subr.mxu0 0.0
    %1728 = vmatpush1.msra.mxu0 %v1705
    %1729 = vmatprep.subr.mxu0 0.0
    %1730 = vmatpush1.msra.mxu0 %v1706
    %1731 = vmatprep.subr.mxu0 0.0
    %1732 = vmatpush1.msra.mxu0 %v1707
    %1733 = vmatprep.subr.mxu0 0.0
    %1734 = vmatpush1.msra.mxu0 %v1708
    %1735 = vmatprep.subr.mxu0 0.0
    %1736 = vmatpush1.msra.mxu0 %v1709
    %1737 = vmatprep.subr.mxu0 0.0
    %1738 = vmatpush1.msra.mxu0 %v1710
    %1739 = vmatprep.subr.mxu0 0.0
    %1740 = vmatpush1.msra.mxu0 %v1711
    %1741 = vmatprep.subr.mxu0 0.0
    %1742 = vmatpush1.msra.mxu0 %v1712
    %1743 = vmatprep.subr.mxu0 0.0
    %1744 = vmatpush1.msra.mxu0 %v1713
    %1745 = vmatprep.subr.mxu0 0.0
    %1746 = vmatpush1.msra.mxu0 %v1714
    %1747 = vmatprep.subr.mxu0 0.0
    %1748 = vmatpush1.msra.mxu0 %v1715
    %1749 = vmatprep.subr.mxu0 0.0
    %1750 = vmatpush1.msra.mxu0 %v1716
    %1751 = vmatprep.subr.mxu0 0.0
    %1752 = vmatpush1.msra.mxu0 %v1717
    %1753 = vmatprep.subr.mxu0 0.0
    %1754 = vmatpush1.msra.mxu0 %v1718
    %1755 = vmatprep.subr.mxu0 0.0
    %1756 = vmatpush1.msra.mxu0 %v1719
    %1757 = vmatprep.subr.mxu0 0.0
    %1758 = vmatpush1.msra.mxu0 0.0
    %1759 = vmatprep.subr.mxu0 0.0
    %1760 = vmatpush1.msra.mxu0 0.0
    %1761 = vmatprep.subr.mxu0 0.0
    %1762 = vmatpush1.msra.mxu0 0.0
    %1763 = vmatprep.subr.mxu0 0.0
    %1764 = vmatpush1.msra.mxu0 0.0
    %1765 = vmatprep.subr.mxu0 0.0
    %1766 = vmatpush1.msra.mxu0 0.0
    %1767 = vmatprep.subr.mxu0 0.0
    %1768 = vmatpush1.msra.mxu0 0.0
    %1769 = vmatprep.subr.mxu0 0.0
    %1770 = vmatpush1.msra.mxu0 0.0
    %1771 = vmatprep.subr.mxu0 0.0
    %1772 = vmatpush1.msra.mxu0 0.0
    %1773 = vmatprep.subr.mxu0 0.0
    %1774 = vmatpush1.msra.mxu0 0.0
    %1775 = vmatprep.subr.mxu0 0.0
    %1776 = vmatpush1.msra.mxu0 0.0
    %1777 = vmatprep.subr.mxu0 0.0
    %1778 = vmatpush1.msra.mxu0 0.0
    %1779 = vmatprep.subr.mxu0 0.0
    %1780 = vmatpush1.msra.mxu0 0.0
    %1781 = vmatprep.subr.mxu0 0.0
    %1782 = vmatpush1.msra.mxu0 0.0
    %1783 = vmatprep.subr.mxu0 0.0
    %1784 = vmatpush1.msra.mxu0 0.0
    %1785 = vmatprep.subr.mxu0 0.0
    %1786 = vmatpush1.msra.mxu0 0.0
    %1787 = vmatprep.subr.mxu0 0.0
    %1788 = vmatpush1.msra.mxu0 0.0
    %1789 = vmatprep.mubr.f32.mxu0 0.0
    %1790 = vmatmul.mubr.f32.gmra.mrb[0].mxu0 %v1701
    %v1791 = vpop.f32.mrb[0].mxu0
    %v1792 = vadd.f32 %v1723, %v1791
    %v1793 = vpop.f32.mrb[0].mxu0
    %1794 = vdwg.mxu0
    %1795 = vst [vmem:[%s3] sm:$0xff] %v1792
    // Predicated region
    $region18: #{basenet_forward.1} parent=1 // pred_check
      _
    $region19: #{basenet_forward.1} parent=1 // pred_check_branch
      %1797 = sbr.rel (0) target = $region21
    $region20: #{basenet_forward.1} parent=1 // pred_region
      _
    $region21: #{basenet_forward.1} parent=1 // pred_fallthru
      _
    // Predicated region
    $region22: #{basenet_forward.1} parent=1 // pred_check
      _
    $region23: #{basenet_forward.1} parent=1 // pred_check_branch
      %1799 = sbr.rel (0) target = $region25
    $region24: #{basenet_forward.1} parent=1 // pred_region
      _
    $region25: #{basenet_forward.1} parent=1 // pred_fallthru
      _
    %1800 = vsyncpa [#allocation3], 1

</llo_original>
